<compile_context>
chip_gen: v6e
topology: v6e:2x2x1
jax: 0.10.0
libtpu: 0.0.40
codegen_flags: <defaults>
</compile_context>

<pallas_src>
import numpy as np
import jax
import jax.numpy as jnp
from jax.experimental import pallas as pl
from jax.experimental.pallas import tpu as pltpu


def _round_up(x, m=128):
    return ((x + m - 1) // m) * m


def _pad2d(a, rows, cols):
    a = jnp.asarray(a, jnp.float32)
    return jnp.pad(a, ((0, rows - a.shape[0]), (0, cols - a.shape[1])))


def _shared_spec(shape):
    """Full-array block whose index is constant across the batch grid axis
    (data is DMA'd once and stays resident in VMEM)."""
    nd = len(shape)
    return pl.BlockSpec(tuple(shape), lambda b, _nd=nd: (0,) * _nd)


# ------------------------------------------------------------------
# Fused per-graph kernel (one grid step == one graph):
#   for each GCN layer:  h = relu( U @ MLP( U^T @ h ) )
#   pooled = mean/sum/max over nodes
#   score  = PReLU( pooled @ W1 + b1 ) @ W2 + b2   (Dropout == identity)
# ------------------------------------------------------------------
def _make_fused_kernel(num_gcn, pool, nodes):
    inv_n = 1.0 / float(nodes)

    def kernel(*refs):
        out_ref = refs[-1]
        ut = refs[0][...]                    # (N, N) f32 shared U^T
        u = refs[1][...]                     # (N, N) f32 shared U
        h = refs[2][0]                       # (N, Dpad) f32, this graph's feats
        p = 3
        # TODO(synk): for many layers / wide hiddens, stack per-layer weights
        # and use lax.fori_loop to bound vreg live ranges; at 2 layers the
        # unrolled static loop is fine.
        for _ in range(num_gcn):
            w1, b1, w2, b2 = refs[p], refs[p + 1], refs[p + 2], refs[p + 3]
            p += 4
            # agg_feats = U^T @ features   (shared basis, f32 for fidelity)
            agg = jnp.dot(ut, h, preferred_element_type=jnp.float32)
            # MLP: Linear -> ReLU -> Linear (bf16 operands, f32 accumulation)
            # TODO(synk): reference GIN-style MLP class was not provided; if it
            #             contains BatchNorm between the linears, outputs differ.
            z = jnp.dot(agg.astype(jnp.bfloat16), w1[...],
                        preferred_element_type=jnp.float32) + b1[...]
            z = jnp.maximum(z, 0.0)
            y = jnp.dot(z.astype(jnp.bfloat16), w2[...],
                        preferred_element_type=jnp.float32) + b2[...]
            # back to the vertex domain: U @ out, then the outer F.relu
            y = jnp.dot(u, y, preferred_element_type=jnp.float32)
            h = jnp.maximum(y, 0.0)

        cw1, cb1, alpha, cw2, cb2 = (refs[p], refs[p + 1], refs[p + 2],
                                     refs[p + 3], refs[p + 4])
        if pool == "max":
            pooled = jnp.max(h, axis=0, keepdims=True)          # (1, Hpad)
        elif pool == "sum":
            pooled = jnp.sum(h, axis=0, keepdims=True)
        else:  # mean
            pooled = jnp.sum(h, axis=0, keepdims=True) * inv_n

        # Classifier: Linear(H,128) -> Dropout(identity) -> PReLU(128) -> Linear(128,C)
        # TODO(synk): nn.Dropout(p=final_dropout) treated as identity (inference mode).
        z = jnp.dot(pooled.astype(jnp.bfloat16), cw1[...],
                    preferred_element_type=jnp.float32) + cb1[...]
        a = alpha[...]
        z = jnp.where(z > 0.0, z, a * z)
        logits = jnp.dot(z.astype(jnp.bfloat16), cw2[...],
                         preferred_element_type=jnp.float32) + cb2[...]
        # Lane-dense unmasked store: replicate across the 8 sublanes of the
        # per-graph output block; host keeps row 0 and slices off lane padding.
        out_ref[...] = jnp.broadcast_to(logits.reshape(1, 1, -1), out_ref.shape)

    return kernel


# ------------------------------------------------------------------
# Graph spectral preprocessing (glue, host-side numpy).
# ------------------------------------------------------------------
def compute_U(adj):
    """A = relu(Adj); D = degree matrix; Lnorm = D^-1/2 (D - A) D^-1/2; eigenvectors."""
    A = np.maximum(np.asarray(adj, dtype=np.float64), 0.0)   # F.relu(self.Adj)
    out_deg = A.sum(axis=0)
    in_deg = A.sum(axis=1)
    deg = in_deg + out_deg - np.diag(A)                       # Comp_degree
    D = np.diag(deg)
    L = D - A
    d_inv_sqrt = np.where(deg > 0, deg ** -0.5, 0.0)          # fractional_matrix_power(D,-0.5)
    Dm = np.diag(d_inv_sqrt)
    Ln = Dm @ L @ Dm
    # TODO(synk): torch.eig (general, unsorted) replaced by symmetric eigh; a
    #             different eigenbasis ordering/sign changes exact outputs.
    _, U = np.linalg.eigh(Ln)
    return jnp.asarray(U, dtype=jnp.float32)


# ------------------------------------------------------------------
# Full forward (host prep + one fused pallas_call over a batch grid).
# ------------------------------------------------------------------
def graph_cnn_ortega_forward(x, adj, gcn_params, clf_params, *, pool="mean"):
    B, N, Din = x.shape
    U = compute_U(adj)                                      # (N, N) f32
    Ut = U.T                                                # host-side transpose

    # Zero-pad the feature (lane) dim to a multiple of 128; keep batch 3-D so
    # the grid can block one graph per step.
    Dp = _round_up(Din)
    h0 = jnp.pad(x.astype(jnp.float32), ((0, 0), (0, 0), (0, Dp - Din)))

    inputs = [jnp.asarray(Ut, jnp.float32), jnp.asarray(U, jnp.float32), h0]
    in_specs = [_shared_spec((N, N)), _shared_spec((N, N)),
                pl.BlockSpec((1, N, Dp), lambda b: (b, 0, 0))]

    for (w1, b1, w2, b2) in gcn_params:
        din, hm = w1.shape
        dout = w2.shape[1]
        dinp, hmp, doutp = _round_up(din), _round_up(hm), _round_up(dout)
        layer_in = [_pad2d(w1, dinp, hmp).astype(jnp.bfloat16),
                    _pad2d(b1, 1, hmp),                     # biases stay f32
                    _pad2d(w2, hmp, doutp).astype(jnp.bfloat16),
                    _pad2d(b2, 1, doutp)]
        inputs += layer_in
        in_specs += [_shared_spec(a.shape) for a in layer_in]

    cw1, cb1, alpha, cw2, cb2 = clf_params
    hin, c1 = cw1.shape
    cout = cw2.shape[1]
    hinp, c1p, coutp = _round_up(hin), _round_up(c1), _round_up(cout)
    clf_in = [_pad2d(cw1, hinp, c1p).astype(jnp.bfloat16),
              _pad2d(cb1, 1, c1p),
              _pad2d(alpha, 1, c1p),
              _pad2d(cw2, c1p, coutp).astype(jnp.bfloat16),
              _pad2d(cb2, 1, coutp)]
    inputs += clf_in
    in_specs += [_shared_spec(a.shape) for a in clf_in]

    kernel = _make_fused_kernel(len(gcn_params), pool, N)
    # Grid over graphs: the shared (N,N) basis and all weights use constant
    # block indices (DMA'd once, resident in VMEM); only the per-graph feature
    # block and the per-graph output block change per step.  The batch axis is
    # "parallel" so v7x can shard it across its two TensorCores.
    out = pl.pallas_call(
        kernel,
        out_shape=jax.ShapeDtypeStruct((B, 8, coutp), jnp.float32),
        grid=(B,),
        in_specs=in_specs,
        out_specs=pl.BlockSpec((1, 8, coutp), lambda b: (b, 0, 0)),
        compiler_params=pltpu.CompilerParams(
            dimension_semantics=("parallel",),
            vmem_limit_bytes=32 * 1024 * 1024),
    )(*inputs)
    return out[:, 0, :cout]                                 # drop sublane/lane padding


# ------------------------------------------------------------------
# Parameter initialization (deterministic, in-script).
# ------------------------------------------------------------------
def init_linear_xavier(key, fan_in, fan_out):
    # xavier_uniform_ on weight, zeros on bias (as in GraphConv_Ortega.__init__)
    bound = float(np.sqrt(6.0 / (fan_in + fan_out)))
    w = jax.random.uniform(key, (fan_in, fan_out), jnp.float32, -bound, bound)
    b = jnp.zeros((1, fan_out), jnp.float32)
    return w, b


def init_linear_default(key, fan_in, fan_out):
    # PyTorch nn.Linear default init (uniform +/- 1/sqrt(fan_in))
    kw, kb = jax.random.split(key)
    bound = 1.0 / float(np.sqrt(fan_in))
    w = jax.random.uniform(kw, (fan_in, fan_out), jnp.float32, -bound, bound)
    b = jax.random.uniform(kb, (1, fan_out), jnp.float32, -bound, bound)
    return w, b


if __name__ == "__main__":
    key = jax.random.PRNGKey(0)
    keys = jax.random.split(key, 16)

    # Small shapes consistent with the module
    B, N = 2, 16                  # batch graphs, nodes per graph
    input_dim, hidden_dim, output_dim = 8, 32, 5
    num_layers = 2                # number of GCN layers
    mlp_hidden = 128              # GraphConv_Ortega MLP default hidden_dim
    pool = "mean"                 # graph_pooling_type

    # Adjacency (the `adj` ctor argument), symmetric & positive so relu keeps it
    adj = jax.random.uniform(keys[0], (N, N), jnp.float32, 0.1, 1.0)
    adj = 0.5 * (adj + adj.T)

    # Node features: cat of graph.node_features.view(1, -1, input_dim) -> (B, N, input_dim)
    x = jax.random.normal(keys[1], (B, N, input_dim), jnp.float32)

    # GCN layer parameters (MLP: Linear(din,128) -> ReLU -> Linear(128,dout))
    gcn_params = []
    dims = [(input_dim, hidden_dim)] + [(hidden_dim, hidden_dim)] * (num_layers - 1)
    for li, (din, dout) in enumerate(dims):
        w1, b1 = init_linear_xavier(keys[2 + 2 * li], din, mlp_hidden)
        w2, b2 = init_linear_xavier(keys[3 + 2 * li], mlp_hidden, dout)
        gcn_params.append((w1, b1, w2, b2))

    # Classifier: Linear(hidden,128), Dropout, PReLU(128) (alpha=0.25), Linear(128,out)
    cw1, cb1 = init_linear_default(keys[10], hidden_dim, 128)
    alpha = jnp.full((1, 128), 0.25, jnp.float32)
    cw2, cb2 = init_linear_default(keys[11], 128, output_dim)
    clf_params = (cw1, cb1, alpha, cw2, cb2)

    score = graph_cnn_ortega_forward(x, adj, gcn_params, clf_params, pool=pool)
    jax.block_until_ready(score)
    assert score.shape == (B, output_dim)
    print("KERNEL_OK")
</pallas_src>

<mosaic_0001>
module attributes {stable_mosaic.version = 11 : i64} {
  func.func @kernel(%arg0: i32, %arg1: memref<16x16xf32, #tpu.memory_space<vmem>>, %arg2: memref<16x16xf32, #tpu.memory_space<vmem>>, %arg3: memref<1x16x128xf32, #tpu.memory_space<vmem>>, %arg4: memref<128x128xbf16, #tpu.memory_space<vmem>>, %arg5: memref<1x128xf32, #tpu.memory_space<vmem>>, %arg6: memref<128x128xbf16, #tpu.memory_space<vmem>>, %arg7: memref<1x128xf32, #tpu.memory_space<vmem>>, %arg8: memref<128x128xbf16, #tpu.memory_space<vmem>>, %arg9: memref<1x128xf32, #tpu.memory_space<vmem>>, %arg10: memref<128x128xbf16, #tpu.memory_space<vmem>>, %arg11: memref<1x128xf32, #tpu.memory_space<vmem>>, %arg12: memref<128x128xbf16, #tpu.memory_space<vmem>>, %arg13: memref<1x128xf32, #tpu.memory_space<vmem>>, %arg14: memref<1x128xf32, #tpu.memory_space<vmem>>, %arg15: memref<128x128xbf16, #tpu.memory_space<vmem>>, %arg16: memref<1x128xf32, #tpu.memory_space<vmem>>, %arg17: memref<1x8x128xf32, #tpu.memory_space<vmem>>) attributes {dimension_semantics = [#tpu.dimension_semantics<parallel>], iteration_bounds = array<i64: 2>, scalar_prefetch = 0 : i64, scratch_operands = 0 : i64, tpu.core_type = #tpu.core_type<tc>, window_params = [{pipeline_mode = #tpu.pipeline_mode<synchronous>, transform_indices = @transform_0, window_bounds = array<i64: 16, 16>}, {pipeline_mode = #tpu.pipeline_mode<synchronous>, transform_indices = @transform_1, window_bounds = array<i64: 16, 16>}, {transform_indices = @transform_2, window_bounds = array<i64: 1, 16, 128>}, {pipeline_mode = #tpu.pipeline_mode<synchronous>, transform_indices = @transform_3, window_bounds = array<i64: 128, 128>}, {pipeline_mode = #tpu.pipeline_mode<synchronous>, transform_indices = @transform_4, window_bounds = array<i64: 1, 128>}, {pipeline_mode = #tpu.pipeline_mode<synchronous>, transform_indices = @transform_5, window_bounds = array<i64: 128, 128>}, {pipeline_mode = #tpu.pipeline_mode<synchronous>, transform_indices = @transform_6, window_bounds = array<i64: 1, 128>}, {pipeline_mode = #tpu.pipeline_mode<synchronous>, transform_indices = @transform_7, window_bounds = array<i64: 128, 128>}, {pipeline_mode = #tpu.pipeline_mode<synchronous>, transform_indices = @transform_8, window_bounds = array<i64: 1, 128>}, {pipeline_mode = #tpu.pipeline_mode<synchronous>, transform_indices = @transform_9, window_bounds = array<i64: 128, 128>}, {pipeline_mode = #tpu.pipeline_mode<synchronous>, transform_indices = @transform_10, window_bounds = array<i64: 1, 128>}, {pipeline_mode = #tpu.pipeline_mode<synchronous>, transform_indices = @transform_11, window_bounds = array<i64: 128, 128>}, {pipeline_mode = #tpu.pipeline_mode<synchronous>, transform_indices = @transform_12, window_bounds = array<i64: 1, 128>}, {pipeline_mode = #tpu.pipeline_mode<synchronous>, transform_indices = @transform_13, window_bounds = array<i64: 1, 128>}, {pipeline_mode = #tpu.pipeline_mode<synchronous>, transform_indices = @transform_14, window_bounds = array<i64: 128, 128>}, {pipeline_mode = #tpu.pipeline_mode<synchronous>, transform_indices = @transform_15, window_bounds = array<i64: 1, 128>}, {transform_indices = @transform_16, window_bounds = array<i64: 1, 8, 128>}]} {
    %c0 = arith.constant 0 : index
    %c0_0 = arith.constant 0 : index
    %0 = vector.load %arg1[%c0, %c0_0] : memref<16x16xf32, #tpu.memory_space<vmem>>, vector<16x16xf32>
    %c0_1 = arith.constant 0 : index
    %c0_2 = arith.constant 0 : index
    %1 = vector.load %arg2[%c0_1, %c0_2] : memref<16x16xf32, #tpu.memory_space<vmem>>, vector<16x16xf32>
    %c0_3 = arith.constant 0 : index
    %c0_4 = arith.constant 0 : index
    %c0_5 = arith.constant 0 : index
    %2 = vector.load %arg3[%c0_3, %c0_4, %c0_5] : memref<1x16x128xf32, #tpu.memory_space<vmem>>, vector<1x16x128xf32>
    %3 = vector.shape_cast %2 : vector<1x16x128xf32> to vector<16x128xf32>
    %cst = arith.constant dense<0.000000e+00> : vector<16x128xf32>
    %4 = tpu.matmul %0, %3, %cst {dimension_numbers = #tpu.dot_dimension_numbers<[1], [0], [0], [1], [0, 0, 1, 1], [], []>} : vector<16x16xf32>, vector<16x128xf32>, vector<16x128xf32> -> vector<16x128xf32>
    %5 = arith.truncf %4 : vector<16x128xf32> to vector<16x128xbf16>
    %c0_6 = arith.constant 0 : index
    %c0_7 = arith.constant 0 : index
    %6 = vector.load %arg4[%c0_6, %c0_7] : memref<128x128xbf16, #tpu.memory_space<vmem>>, vector<128x128xbf16>
    %cst_8 = arith.constant dense<0.000000e+00> : vector<16x128xf32>
    %7 = tpu.matmul %5, %6, %cst_8 {dimension_numbers = #tpu.dot_dimension_numbers<[1], [0], [0], [1], [0, 0, 1, 1], [], []>} : vector<16x128xbf16>, vector<128x128xbf16>, vector<16x128xf32> -> vector<16x128xf32>
    %c0_9 = arith.constant 0 : index
    %c0_10 = arith.constant 0 : index
    %8 = vector.load %arg5[%c0_9, %c0_10] : memref<1x128xf32, #tpu.memory_space<vmem>>, vector<1x128xf32>
    %9 = vector.broadcast %8 : vector<1x128xf32> to vector<16x128xf32>
    %10 = arith.addf %7, %9 : vector<16x128xf32>
    %cst_11 = arith.constant 0.000000e+00 : f32
    %11 = vector.broadcast %cst_11 : f32 to vector<16x128xf32>
    %12 = arith.maximumf %10, %11 : vector<16x128xf32>
    %13 = arith.truncf %12 : vector<16x128xf32> to vector<16x128xbf16>
    %c0_12 = arith.constant 0 : index
    %c0_13 = arith.constant 0 : index
    %14 = vector.load %arg6[%c0_12, %c0_13] : memref<128x128xbf16, #tpu.memory_space<vmem>>, vector<128x128xbf16>
    %cst_14 = arith.constant dense<0.000000e+00> : vector<16x128xf32>
    %15 = tpu.matmul %13, %14, %cst_14 {dimension_numbers = #tpu.dot_dimension_numbers<[1], [0], [0], [1], [0, 0, 1, 1], [], []>} : vector<16x128xbf16>, vector<128x128xbf16>, vector<16x128xf32> -> vector<16x128xf32>
    %c0_15 = arith.constant 0 : index
    %c0_16 = arith.constant 0 : index
    %16 = vector.load %arg7[%c0_15, %c0_16] : memref<1x128xf32, #tpu.memory_space<vmem>>, vector<1x128xf32>
    %17 = vector.broadcast %16 : vector<1x128xf32> to vector<16x128xf32>
    %18 = arith.addf %15, %17 : vector<16x128xf32>
    %cst_17 = arith.constant dense<0.000000e+00> : vector<16x128xf32>
    %19 = tpu.matmul %1, %18, %cst_17 {dimension_numbers = #tpu.dot_dimension_numbers<[1], [0], [0], [1], [0, 0, 1, 1], [], []>} : vector<16x16xf32>, vector<16x128xf32>, vector<16x128xf32> -> vector<16x128xf32>
    %cst_18 = arith.constant 0.000000e+00 : f32
    %20 = vector.broadcast %cst_18 : f32 to vector<16x128xf32>
    %21 = arith.maximumf %19, %20 : vector<16x128xf32>
    %cst_19 = arith.constant dense<0.000000e+00> : vector<16x128xf32>
    %22 = tpu.matmul %0, %21, %cst_19 {dimension_numbers = #tpu.dot_dimension_numbers<[1], [0], [0], [1], [0, 0, 1, 1], [], []>} : vector<16x16xf32>, vector<16x128xf32>, vector<16x128xf32> -> vector<16x128xf32>
    %23 = arith.truncf %22 : vector<16x128xf32> to vector<16x128xbf16>
    %c0_20 = arith.constant 0 : index
    %c0_21 = arith.constant 0 : index
    %24 = vector.load %arg8[%c0_20, %c0_21] : memref<128x128xbf16, #tpu.memory_space<vmem>>, vector<128x128xbf16>
    %cst_22 = arith.constant dense<0.000000e+00> : vector<16x128xf32>
    %25 = tpu.matmul %23, %24, %cst_22 {dimension_numbers = #tpu.dot_dimension_numbers<[1], [0], [0], [1], [0, 0, 1, 1], [], []>} : vector<16x128xbf16>, vector<128x128xbf16>, vector<16x128xf32> -> vector<16x128xf32>
    %c0_23 = arith.constant 0 : index
    %c0_24 = arith.constant 0 : index
    %26 = vector.load %arg9[%c0_23, %c0_24] : memref<1x128xf32, #tpu.memory_space<vmem>>, vector<1x128xf32>
    %27 = vector.broadcast %26 : vector<1x128xf32> to vector<16x128xf32>
    %28 = arith.addf %25, %27 : vector<16x128xf32>
    %cst_25 = arith.constant 0.000000e+00 : f32
    %29 = vector.broadcast %cst_25 : f32 to vector<16x128xf32>
    %30 = arith.maximumf %28, %29 : vector<16x128xf32>
    %31 = arith.truncf %30 : vector<16x128xf32> to vector<16x128xbf16>
    %c0_26 = arith.constant 0 : index
    %c0_27 = arith.constant 0 : index
    %32 = vector.load %arg10[%c0_26, %c0_27] : memref<128x128xbf16, #tpu.memory_space<vmem>>, vector<128x128xbf16>
    %cst_28 = arith.constant dense<0.000000e+00> : vector<16x128xf32>
    %33 = tpu.matmul %31, %32, %cst_28 {dimension_numbers = #tpu.dot_dimension_numbers<[1], [0], [0], [1], [0, 0, 1, 1], [], []>} : vector<16x128xbf16>, vector<128x128xbf16>, vector<16x128xf32> -> vector<16x128xf32>
    %c0_29 = arith.constant 0 : index
    %c0_30 = arith.constant 0 : index
    %34 = vector.load %arg11[%c0_29, %c0_30] : memref<1x128xf32, #tpu.memory_space<vmem>>, vector<1x128xf32>
    %35 = vector.broadcast %34 : vector<1x128xf32> to vector<16x128xf32>
    %36 = arith.addf %33, %35 : vector<16x128xf32>
    %cst_31 = arith.constant dense<0.000000e+00> : vector<16x128xf32>
    %37 = tpu.matmul %1, %36, %cst_31 {dimension_numbers = #tpu.dot_dimension_numbers<[1], [0], [0], [1], [0, 0, 1, 1], [], []>} : vector<16x16xf32>, vector<16x128xf32>, vector<16x128xf32> -> vector<16x128xf32>
    %cst_32 = arith.constant 0.000000e+00 : f32
    %38 = vector.broadcast %cst_32 : f32 to vector<16x128xf32>
    %39 = arith.maximumf %37, %38 : vector<16x128xf32>
    %cst_33 = arith.constant dense<0.000000e+00> : vector<128xf32>
    %40 = vector.multi_reduction <add>, %39, %cst_33 [0] : vector<16x128xf32> to vector<128xf32>
    %41 = vector.shape_cast %40 : vector<128xf32> to vector<1x128xf32>
    %cst_34 = arith.constant 6.250000e-02 : f32
    %42 = vector.broadcast %cst_34 : f32 to vector<1x128xf32>
    %43 = arith.mulf %41, %42 : vector<1x128xf32>
    %44 = arith.truncf %43 : vector<1x128xf32> to vector<1x128xbf16>
    %c0_35 = arith.constant 0 : index
    %c0_36 = arith.constant 0 : index
    %45 = vector.load %arg12[%c0_35, %c0_36] : memref<128x128xbf16, #tpu.memory_space<vmem>>, vector<128x128xbf16>
    %cst_37 = arith.constant dense<0.000000e+00> : vector<1x128xf32>
    %46 = tpu.matmul %44, %45, %cst_37 {dimension_numbers = #tpu.dot_dimension_numbers<[1], [0], [0], [1], [0, 0, 1, 1], [], []>} : vector<1x128xbf16>, vector<128x128xbf16>, vector<1x128xf32> -> vector<1x128xf32>
    %c0_38 = arith.constant 0 : index
    %c0_39 = arith.constant 0 : index
    %47 = vector.load %arg13[%c0_38, %c0_39] : memref<1x128xf32, #tpu.memory_space<vmem>>, vector<1x128xf32>
    %48 = arith.addf %46, %47 : vector<1x128xf32>
    %c0_40 = arith.constant 0 : index
    %c0_41 = arith.constant 0 : index
    %49 = vector.load %arg14[%c0_40, %c0_41] : memref<1x128xf32, #tpu.memory_space<vmem>>, vector<1x128xf32>
    %cst_42 = arith.constant 0.000000e+00 : f32
    %50 = vector.broadcast %cst_42 : f32 to vector<1x128xf32>
    %51 = arith.cmpf ogt, %48, %50 : vector<1x128xf32>
    %52 = arith.mulf %49, %48 : vector<1x128xf32>
    %53 = arith.select %51, %48, %52 : vector<1x128xi1>, vector<1x128xf32>
    %54 = arith.truncf %53 : vector<1x128xf32> to vector<1x128xbf16>
    %c0_43 = arith.constant 0 : index
    %c0_44 = arith.constant 0 : index
    %55 = vector.load %arg15[%c0_43, %c0_44] : memref<128x128xbf16, #tpu.memory_space<vmem>>, vector<128x128xbf16>
    %cst_45 = arith.constant dense<0.000000e+00> : vector<1x128xf32>
    %56 = tpu.matmul %54, %55, %cst_45 {dimension_numbers = #tpu.dot_dimension_numbers<[1], [0], [0], [1], [0, 0, 1, 1], [], []>} : vector<1x128xbf16>, vector<128x128xbf16>, vector<1x128xf32> -> vector<1x128xf32>
    %c0_46 = arith.constant 0 : index
    %c0_47 = arith.constant 0 : index
    %57 = vector.load %arg16[%c0_46, %c0_47] : memref<1x128xf32, #tpu.memory_space<vmem>>, vector<1x128xf32>
    %58 = arith.addf %56, %57 : vector<1x128xf32>
    %59 = vector.shape_cast %58 : vector<1x128xf32> to vector<1x1x128xf32>
    %60 = vector.shape_cast %59 : vector<1x1x128xf32> to vector<1x1x128xf32>
    %61 = vector.broadcast %60 : vector<1x1x128xf32> to vector<1x8x128xf32>
    %c0_48 = arith.constant 0 : index
    %c0_49 = arith.constant 0 : index
    %c0_50 = arith.constant 0 : index
    %62 = vector.load %arg17[%c0_48, %c0_49, %c0_50] : memref<1x8x128xf32, #tpu.memory_space<vmem>>, vector<1x8x128xf32>
    tpu.vector_store %arg17[%c0_48, %c0_49, %c0_50], %61 {strides = array<i32>} : memref<1x8x128xf32, #tpu.memory_space<vmem>>, vector<1x8x128xf32>,
    return
  }
  func.func @transform_0(%arg0: i32) -> (i32, i32) {
    %c0_i32 = arith.constant 0 : i32
    %c0_i32_0 = arith.constant 0 : i32
    %c0_i32_1 = arith.constant 0 : i32
    return %c0_i32, %c0_i32_0 : i32, i32
  }
  func.func @transform_1(%arg0: i32) -> (i32, i32) {
    %c0_i32 = arith.constant 0 : i32
    %c0_i32_0 = arith.constant 0 : i32
    %c0_i32_1 = arith.constant 0 : i32
    return %c0_i32, %c0_i32_0 : i32, i32
  }
  func.func @transform_2(%arg0: i32) -> (i32, i32, i32) {
    %c0_i32 = arith.constant 0 : i32
    %c0_i32_0 = arith.constant 0 : i32
    %c0_i32_1 = arith.constant 0 : i32
    return %arg0, %c0_i32, %c0_i32_0 : i32, i32, i32
  }
  func.func @transform_3(%arg0: i32) -> (i32, i32) {
    %c0_i32 = arith.constant 0 : i32
    %c0_i32_0 = arith.constant 0 : i32
    %c0_i32_1 = arith.constant 0 : i32
    return %c0_i32, %c0_i32_0 : i32, i32
  }
  func.func @transform_4(%arg0: i32) -> (i32, i32) {
    %c0_i32 = arith.constant 0 : i32
    %c0_i32_0 = arith.constant 0 : i32
    %c0_i32_1 = arith.constant 0 : i32
    return %c0_i32, %c0_i32_0 : i32, i32
  }
  func.func @transform_5(%arg0: i32) -> (i32, i32) {
    %c0_i32 = arith.constant 0 : i32
    %c0_i32_0 = arith.constant 0 : i32
    %c0_i32_1 = arith.constant 0 : i32
    return %c0_i32, %c0_i32_0 : i32, i32
  }
  func.func @transform_6(%arg0: i32) -> (i32, i32) {
    %c0_i32 = arith.constant 0 : i32
    %c0_i32_0 = arith.constant 0 : i32
    %c0_i32_1 = arith.constant 0 : i32
    return %c0_i32, %c0_i32_0 : i32, i32
  }
  func.func @transform_7(%arg0: i32) -> (i32, i32) {
    %c0_i32 = arith.constant 0 : i32
    %c0_i32_0 = arith.constant 0 : i32
    %c0_i32_1 = arith.constant 0 : i32
    return %c0_i32, %c0_i32_0 : i32, i32
  }
  func.func @transform_8(%arg0: i32) -> (i32, i32) {
    %c0_i32 = arith.constant 0 : i32
    %c0_i32_0 = arith.constant 0 : i32
    %c0_i32_1 = arith.constant 0 : i32
    return %c0_i32, %c0_i32_0 : i32, i32
  }
  func.func @transform_9(%arg0: i32) -> (i32, i32) {
    %c0_i32 = arith.constant 0 : i32
    %c0_i32_0 = arith.constant 0 : i32
    %c0_i32_1 = arith.constant 0 : i32
    return %c0_i32, %c0_i32_0 : i32, i32
  }
  func.func @transform_10(%arg0: i32) -> (i32, i32) {
    %c0_i32 = arith.constant 0 : i32
    %c0_i32_0 = arith.constant 0 : i32
    %c0_i32_1 = arith.constant 0 : i32
    return %c0_i32, %c0_i32_0 : i32, i32
  }
  func.func @transform_11(%arg0: i32) -> (i32, i32) {
    %c0_i32 = arith.constant 0 : i32
    %c0_i32_0 = arith.constant 0 : i32
    %c0_i32_1 = arith.constant 0 : i32
    return %c0_i32, %c0_i32_0 : i32, i32
  }
  func.func @transform_12(%arg0: i32) -> (i32, i32) {
    %c0_i32 = arith.constant 0 : i32
    %c0_i32_0 = arith.constant 0 : i32
    %c0_i32_1 = arith.constant 0 : i32
    return %c0_i32, %c0_i32_0 : i32, i32
  }
  func.func @transform_13(%arg0: i32) -> (i32, i32) {
    %c0_i32 = arith.constant 0 : i32
    %c0_i32_0 = arith.constant 0 : i32
    %c0_i32_1 = arith.constant 0 : i32
    return %c0_i32, %c0_i32_0 : i32, i32
  }
  func.func @transform_14(%arg0: i32) -> (i32, i32) {
    %c0_i32 = arith.constant 0 : i32
    %c0_i32_0 = arith.constant 0 : i32
    %c0_i32_1 = arith.constant 0 : i32
    return %c0_i32, %c0_i32_0 : i32, i32
  }
  func.func @transform_15(%arg0: i32) -> (i32, i32) {
    %c0_i32 = arith.constant 0 : i32
    %c0_i32_0 = arith.constant 0 : i32
    %c0_i32_1 = arith.constant 0 : i32
    return %c0_i32, %c0_i32_0 : i32, i32
  }
  func.func @transform_16(%arg0: i32) -> (i32, i32, i32) {
    %c0_i32 = arith.constant 0 : i32
    %c0_i32_0 = arith.constant 0 : i32
    %c0_i32_1 = arith.constant 0 : i32
    return %arg0, %c0_i32, %c0_i32_0 : i32, i32, i32
  }
}

</mosaic_0001>

<llo_original>
// kernel: tpu_custom_call.1
$region0: #{tpu_custom_call.1}
  #allocation0 [shape = 'u32[]', space=smem, size = 0x4, offset = 0x4, fixed_abs, tag = 'smem constant byte address 0x4 - core index']
  #allocation1 [shape = 'u32[144,128]{1,0:T(1,128)}', space=vmem, size = 0x12000, scoped, tag = 'internal scratch']
  %s0 = inlined_call_operand.hbm [shape: f32[16,16], index: 0, kind: input, shape index: {}]
  %s1 = inlined_call_operand.hbm [shape: f32[16,16], index: 1, kind: input, shape index: {}]
  %s2 = inlined_call_operand.hbm [shape: f32[2,16,128], index: 2, kind: input, shape index: {}]
  %s3 = inlined_call_operand.hbm [shape: bf16[128,128], index: 3, kind: input, shape index: {}]
  %s4 = inlined_call_operand.vmem [shape: f32[1,128], index: 4, kind: input, shape index: {}]
  %s5 = inlined_call_operand.hbm [shape: bf16[128,128], index: 5, kind: input, shape index: {}]
  %s6 = inlined_call_operand.vmem [shape: f32[1,128], index: 6, kind: input, shape index: {}]
  %s7 = inlined_call_operand.hbm [shape: bf16[128,128], index: 7, kind: input, shape index: {}]
  %s8 = inlined_call_operand.vmem [shape: f32[1,128], index: 8, kind: input, shape index: {}]
  %s9 = inlined_call_operand.hbm [shape: bf16[128,128], index: 9, kind: input, shape index: {}]
  %s10 = inlined_call_operand.vmem [shape: f32[1,128], index: 10, kind: input, shape index: {}]
  %s11 = inlined_call_operand.hbm [shape: bf16[128,128], index: 11, kind: input, shape index: {}]
  %s12 = inlined_call_operand.vmem [shape: f32[1,128], index: 12, kind: input, shape index: {}]
  %s13 = inlined_call_operand.vmem [shape: f32[1,128], index: 13, kind: input, shape index: {}]
  %s14 = inlined_call_operand.hbm [shape: bf16[128,128], index: 14, kind: input, shape index: {}]
  %s15 = inlined_call_operand.vmem [shape: f32[1,128], index: 15, kind: input, shape index: {}]
  %s16 = inlined_call_operand.hbm [shape: f32[2,8,128], index: 16, kind: output, shape index: {}]
  %s17 = sld [smem:[#allocation0]]
  $region133: #{tpu_custom_call.1} parent=0
    _
  %s19 = ssub.s32 1, %s17
  %s20 = scalar_select 0, %s19, %s17
  $region1: #{tpu_custom_call.1} parent=0
    #allocation2 [shape = 'u8[8192]{0}', space=vmem, size = 0x2000, scoped, tag = 'input window, operand 0, single buffered']
    #allocation3 [shape = 's32[2]{0}', space=sflag, size = 0x8, scoped, tag = 'scoped memory for tpu_custom_call.1']
    #allocation4 [shape = 's32[2]{0}', space=sflag, size = 0x8, scoped, tag = 'scoped memory for tpu_custom_call.1']
    #allocation5 [shape = 'u8[8192]{0}', space=vmem, size = 0x2000, scoped, tag = 'input window, operand 1, single buffered']
    #allocation6 [shape = 's32[1]{0}', space=sflag, size = 0x4, scoped, tag = 'scoped memory for tpu_custom_call.1']
    #allocation7 [shape = 'u8[16384]{0}', space=vmem, size = 0x4000, scoped, tag = 'input window, operand 2']
    #allocation8 [shape = 'u8[32768]{0}', space=vmem, size = 0x8000, scoped, tag = 'input window, operand 3, single buffered']
    #allocation9 [shape = 'u8[32768]{0}', space=vmem, size = 0x8000, scoped, tag = 'input window, operand 5, single buffered']
    #allocation10 [shape = 's32[1]{0}', space=sflag, size = 0x4, scoped, tag = 'scoped memory for tpu_custom_call.1']
    #allocation11 [shape = 'u8[32768]{0}', space=vmem, size = 0x8000, scoped, tag = 'input window, operand 7, single buffered']
    #allocation12 [shape = 'u8[32768]{0}', space=vmem, size = 0x8000, scoped, tag = 'input window, operand 9, single buffered']
    #allocation13 [shape = 's32[1]{0}', space=sflag, size = 0x4, scoped, tag = 'scoped memory for tpu_custom_call.1']
    #allocation14 [shape = 'u8[32768]{0}', space=vmem, size = 0x8000, scoped, tag = 'input window, operand 11, single buffered']
    #allocation15 [shape = 'u8[32768]{0}', space=vmem, size = 0x8000, scoped, tag = 'input window, operand 14, single buffered']
    #allocation16 [shape = 's32[1]{0}', space=sflag, size = 0x4, scoped, tag = 'scoped memory for tpu_custom_call.1']
    #allocation17 [shape = 'u8[8192]{0}', space=vmem, size = 0x2000, scoped, tag = 'output window, operand 0']
    %21 = vsyncpa [#allocation3], 0
    %22 = vsyncpa [#allocation6], 0
    %23 = vsyncpa [#allocation10], 0
    %24 = vsyncpa [#allocation13], 0
    %25 = vsyncpa [#allocation16], 0
    %26 = vsyncpa [#allocation4], 0
    %s27 = scalar_lea.sflag [#allocation4], 1
    %28 = vsyncpa %s27, 0
    loop: start=0, step=1, limit=4
    $region2: #{tpu_custom_call.1} parent=1 // loop_pre_header
      _
    $region3: #{tpu_custom_call.1} parent=1 // loop_header
      %s30 = sphi 0, %s34
      %p31 = scmp.ge.s32.totalorder %s30, 4
      %s38 = sphi 0, %s38
      %s40 = sphi 0, %s38
      %s41 = sphi 0, %s40
      %s55 = sphi 0, %s41
      %s59 = sphi 0, %s59
      %s61 = sphi 0, %s59
      %s62 = sphi 0, %s61
      %s76 = sphi 0, %s62
      %s82 = sphi 0, %s84
      %s85 = sphi 0, %s82
      %s86 = sphi 0, %s85
      %s102 = sphi 0, %s86
      %s106 = sphi 0, %s106
      %s108 = sphi 0, %s106
      %s109 = sphi 0, %s108
      %s123 = sphi 0, %s109
      %s127 = sphi 0, %s127
      %s129 = sphi 0, %s127
      %s130 = sphi 0, %s129
      %s144 = sphi 0, %s130
      %s148 = sphi 0, %s148
      %s150 = sphi 0, %s148
      %s151 = sphi 0, %s150
      %s165 = sphi 0, %s151
      %s169 = sphi 0, %s169
      %s171 = sphi 0, %s169
      %s172 = sphi 0, %s171
      %s186 = sphi 0, %s172
      %s190 = sphi 0, %s190
      %s192 = sphi 0, %s190
      %s193 = sphi 0, %s192
      %s207 = sphi 0, %s193
      %s211 = sphi 0, %s211
      %s213 = sphi 0, %s211
      %s214 = sphi 0, %s213
      %s228 = sphi 0, %s214
      %s232 = sphi 0, %s232
      %s234 = sphi 0, %s232
      %s235 = sphi 0, %s234
      %s249 = sphi 0, %s235
      %s253 = sphi 0, %s253
      %s255 = sphi 0, %s253
      %s256 = sphi 0, %s255
      %s270 = sphi 0, %s256
      %s274 = sphi 0, %s274
      %s276 = sphi 0, %s274
      %s277 = sphi 0, %s276
      %s291 = sphi 0, %s277
      %s295 = sphi 0, %s295
      %s297 = sphi 0, %s295
      %s298 = sphi 0, %s297
      %s312 = sphi 0, %s298
      %s316 = sphi 0, %s316
      %s318 = sphi 0, %s316
      %s319 = sphi 0, %s318
      %s333 = sphi 0, %s319
      %s337 = sphi 0, %s337
      %s339 = sphi 0, %s337
      %s340 = sphi 0, %s339
      %s354 = sphi 0, %s340
      %s358 = sphi 0, %s358
      %s360 = sphi 0, %s358
      %s361 = sphi 0, %s360
      %s375 = sphi 0, %s361
      %s381 = sphi 0, %s383
      %s384 = sphi 0, %s381
      %s385 = sphi 0, %s384
      %s401 = sphi 0, %s385
    $region4: #{tpu_custom_call.1} parent=1 // loop_header_branch
      %33 = sbr.rel (%p31) target = $region8
    $region5: #{tpu_custom_call.1} parent=1 // loop_body
      %s35 = ssub.s32 %s30, 1
      %s36 = ssub.s32 %s30, 2
      %s37 = sadd.s32 %s30, 1
      %s39 = sadd.s32 %s38, 1
      %p42 = scmp.eq.s32.totalorder %s30, 1
      %p43 = scmp.ne.s32.totalorder %s38, %s40
      %p44 = scmp.eq.s32.totalorder %s30, 0
      %p45 = por %p43, %p44
      %p46 = scmp.ne.s32.totalorder %s38, %s40
      %p47 = scmp.eq.s32.totalorder %s35, 1
      %p48 = por %p46, %p47
      %p49 = scmp.ne.s32.totalorder %s40, %s41
      %p50 = scmp.eq.s32.totalorder %s35, 0
      %p51 = por %p49, %p50
      %p52 = scmp.ne.s32.totalorder %s40, %s41
      %p53 = scmp.eq.s32.totalorder %s36, 1
      %p54 = por %p52, %p53
      %p56 = scmp.ne.s32.totalorder %s41, %s55
      %p57 = scmp.eq.s32.totalorder %s36, 0
      %p58 = por %p56, %p57
      %s60 = sadd.s32 %s59, 1
      %p63 = scmp.eq.s32.totalorder %s30, 1
      %p64 = scmp.ne.s32.totalorder %s59, %s61
      %p65 = scmp.eq.s32.totalorder %s30, 0
      %p66 = por %p64, %p65
      %p67 = scmp.ne.s32.totalorder %s59, %s61
      %p68 = scmp.eq.s32.totalorder %s35, 1
      %p69 = por %p67, %p68
      %p70 = scmp.ne.s32.totalorder %s61, %s62
      %p71 = scmp.eq.s32.totalorder %s35, 0
      %p72 = por %p70, %p71
      %p73 = scmp.ne.s32.totalorder %s61, %s62
      %p74 = scmp.eq.s32.totalorder %s36, 1
      %p75 = por %p73, %p74
      %p77 = scmp.ne.s32.totalorder %s62, %s76
      %p78 = scmp.eq.s32.totalorder %s36, 0
      %p79 = por %p77, %p78
      %s80 = ssub.s32 %s30, %s37
      %p81 = scmp.eq.s32.totalorder %s80, 0
      %s83 = sadd.s32 %s82, 1
      %s84 = scalar_select %p81, %s82, %s83
      %p87 = pneg %p81
      %p88 = scmp.eq.s32.totalorder %s30, 1
      %p89 = por %p87, %p88
      %p90 = scmp.ne.s32.totalorder %s82, %s85
      %p91 = scmp.eq.s32.totalorder %s30, 0
      %p92 = por %p90, %p91
      %p93 = scmp.ne.s32.totalorder %s82, %s85
      %p94 = scmp.eq.s32.totalorder %s35, 1
      %p95 = por %p93, %p94
      %p96 = scmp.ne.s32.totalorder %s85, %s86
      %p97 = scmp.eq.s32.totalorder %s35, 0
      %p98 = por %p96, %p97
      %p99 = scmp.ne.s32.totalorder %s85, %s86
      %p100 = scmp.eq.s32.totalorder %s36, 1
      %p101 = por %p99, %p100
      %p103 = scmp.ne.s32.totalorder %s86, %s102
      %p104 = scmp.eq.s32.totalorder %s36, 0
      %p105 = por %p103, %p104
      %s107 = sadd.s32 %s106, 1
      %p110 = scmp.eq.s32.totalorder %s30, 1
      %p111 = scmp.ne.s32.totalorder %s106, %s108
      %p112 = scmp.eq.s32.totalorder %s30, 0
      %p113 = por %p111, %p112
      %p114 = scmp.ne.s32.totalorder %s106, %s108
      %p115 = scmp.eq.s32.totalorder %s35, 1
      %p116 = por %p114, %p115
      %p117 = scmp.ne.s32.totalorder %s108, %s109
      %p118 = scmp.eq.s32.totalorder %s35, 0
      %p119 = por %p117, %p118
      %p120 = scmp.ne.s32.totalorder %s108, %s109
      %p121 = scmp.eq.s32.totalorder %s36, 1
      %p122 = por %p120, %p121
      %p124 = scmp.ne.s32.totalorder %s109, %s123
      %p125 = scmp.eq.s32.totalorder %s36, 0
      %p126 = por %p124, %p125
      %s128 = sadd.s32 %s127, 1
      %p131 = scmp.eq.s32.totalorder %s30, 1
      %p132 = scmp.ne.s32.totalorder %s127, %s129
      %p133 = scmp.eq.s32.totalorder %s30, 0
      %p134 = por %p132, %p133
      %p135 = scmp.ne.s32.totalorder %s127, %s129
      %p136 = scmp.eq.s32.totalorder %s35, 1
      %p137 = por %p135, %p136
      %p138 = scmp.ne.s32.totalorder %s129, %s130
      %p139 = scmp.eq.s32.totalorder %s35, 0
      %p140 = por %p138, %p139
      %p141 = scmp.ne.s32.totalorder %s129, %s130
      %p142 = scmp.eq.s32.totalorder %s36, 1
      %p143 = por %p141, %p142
      %p145 = scmp.ne.s32.totalorder %s130, %s144
      %p146 = scmp.eq.s32.totalorder %s36, 0
      %p147 = por %p145, %p146
      %s149 = sadd.s32 %s148, 1
      %p152 = scmp.eq.s32.totalorder %s30, 1
      %p153 = scmp.ne.s32.totalorder %s148, %s150
      %p154 = scmp.eq.s32.totalorder %s30, 0
      %p155 = por %p153, %p154
      %p156 = scmp.ne.s32.totalorder %s148, %s150
      %p157 = scmp.eq.s32.totalorder %s35, 1
      %p158 = por %p156, %p157
      %p159 = scmp.ne.s32.totalorder %s150, %s151
      %p160 = scmp.eq.s32.totalorder %s35, 0
      %p161 = por %p159, %p160
      %p162 = scmp.ne.s32.totalorder %s150, %s151
      %p163 = scmp.eq.s32.totalorder %s36, 1
      %p164 = por %p162, %p163
      %p166 = scmp.ne.s32.totalorder %s151, %s165
      %p167 = scmp.eq.s32.totalorder %s36, 0
      %p168 = por %p166, %p167
      %s170 = sadd.s32 %s169, 1
      %p173 = scmp.eq.s32.totalorder %s30, 1
      %p174 = scmp.ne.s32.totalorder %s169, %s171
      %p175 = scmp.eq.s32.totalorder %s30, 0
      %p176 = por %p174, %p175
      %p177 = scmp.ne.s32.totalorder %s169, %s171
      %p178 = scmp.eq.s32.totalorder %s35, 1
      %p179 = por %p177, %p178
      %p180 = scmp.ne.s32.totalorder %s171, %s172
      %p181 = scmp.eq.s32.totalorder %s35, 0
      %p182 = por %p180, %p181
      %p183 = scmp.ne.s32.totalorder %s171, %s172
      %p184 = scmp.eq.s32.totalorder %s36, 1
      %p185 = por %p183, %p184
      %p187 = scmp.ne.s32.totalorder %s172, %s186
      %p188 = scmp.eq.s32.totalorder %s36, 0
      %p189 = por %p187, %p188
      %s191 = sadd.s32 %s190, 1
      %p194 = scmp.eq.s32.totalorder %s30, 1
      %p195 = scmp.ne.s32.totalorder %s190, %s192
      %p196 = scmp.eq.s32.totalorder %s30, 0
      %p197 = por %p195, %p196
      %p198 = scmp.ne.s32.totalorder %s190, %s192
      %p199 = scmp.eq.s32.totalorder %s35, 1
      %p200 = por %p198, %p199
      %p201 = scmp.ne.s32.totalorder %s192, %s193
      %p202 = scmp.eq.s32.totalorder %s35, 0
      %p203 = por %p201, %p202
      %p204 = scmp.ne.s32.totalorder %s192, %s193
      %p205 = scmp.eq.s32.totalorder %s36, 1
      %p206 = por %p204, %p205
      %p208 = scmp.ne.s32.totalorder %s193, %s207
      %p209 = scmp.eq.s32.totalorder %s36, 0
      %p210 = por %p208, %p209
      %s212 = sadd.s32 %s211, 1
      %p215 = scmp.eq.s32.totalorder %s30, 1
      %p216 = scmp.ne.s32.totalorder %s211, %s213
      %p217 = scmp.eq.s32.totalorder %s30, 0
      %p218 = por %p216, %p217
      %p219 = scmp.ne.s32.totalorder %s211, %s213
      %p220 = scmp.eq.s32.totalorder %s35, 1
      %p221 = por %p219, %p220
      %p222 = scmp.ne.s32.totalorder %s213, %s214
      %p223 = scmp.eq.s32.totalorder %s35, 0
      %p224 = por %p222, %p223
      %p225 = scmp.ne.s32.totalorder %s213, %s214
      %p226 = scmp.eq.s32.totalorder %s36, 1
      %p227 = por %p225, %p226
      %p229 = scmp.ne.s32.totalorder %s214, %s228
      %p230 = scmp.eq.s32.totalorder %s36, 0
      %p231 = por %p229, %p230
      %s233 = sadd.s32 %s232, 1
      %p236 = scmp.eq.s32.totalorder %s30, 1
      %p237 = scmp.ne.s32.totalorder %s232, %s234
      %p238 = scmp.eq.s32.totalorder %s30, 0
      %p239 = por %p237, %p238
      %p240 = scmp.ne.s32.totalorder %s232, %s234
      %p241 = scmp.eq.s32.totalorder %s35, 1
      %p242 = por %p240, %p241
      %p243 = scmp.ne.s32.totalorder %s234, %s235
      %p244 = scmp.eq.s32.totalorder %s35, 0
      %p245 = por %p243, %p244
      %p246 = scmp.ne.s32.totalorder %s234, %s235
      %p247 = scmp.eq.s32.totalorder %s36, 1
      %p248 = por %p246, %p247
      %p250 = scmp.ne.s32.totalorder %s235, %s249
      %p251 = scmp.eq.s32.totalorder %s36, 0
      %p252 = por %p250, %p251
      %s254 = sadd.s32 %s253, 1
      %p257 = scmp.eq.s32.totalorder %s30, 1
      %p258 = scmp.ne.s32.totalorder %s253, %s255
      %p259 = scmp.eq.s32.totalorder %s30, 0
      %p260 = por %p258, %p259
      %p261 = scmp.ne.s32.totalorder %s253, %s255
      %p262 = scmp.eq.s32.totalorder %s35, 1
      %p263 = por %p261, %p262
      %p264 = scmp.ne.s32.totalorder %s255, %s256
      %p265 = scmp.eq.s32.totalorder %s35, 0
      %p266 = por %p264, %p265
      %p267 = scmp.ne.s32.totalorder %s255, %s256
      %p268 = scmp.eq.s32.totalorder %s36, 1
      %p269 = por %p267, %p268
      %p271 = scmp.ne.s32.totalorder %s256, %s270
      %p272 = scmp.eq.s32.totalorder %s36, 0
      %p273 = por %p271, %p272
      %s275 = sadd.s32 %s274, 1
      %p278 = scmp.eq.s32.totalorder %s30, 1
      %p279 = scmp.ne.s32.totalorder %s274, %s276
      %p280 = scmp.eq.s32.totalorder %s30, 0
      %p281 = por %p279, %p280
      %p282 = scmp.ne.s32.totalorder %s274, %s276
      %p283 = scmp.eq.s32.totalorder %s35, 1
      %p284 = por %p282, %p283
      %p285 = scmp.ne.s32.totalorder %s276, %s277
      %p286 = scmp.eq.s32.totalorder %s35, 0
      %p287 = por %p285, %p286
      %p288 = scmp.ne.s32.totalorder %s276, %s277
      %p289 = scmp.eq.s32.totalorder %s36, 1
      %p290 = por %p288, %p289
      %p292 = scmp.ne.s32.totalorder %s277, %s291
      %p293 = scmp.eq.s32.totalorder %s36, 0
      %p294 = por %p292, %p293
      %s296 = sadd.s32 %s295, 1
      %p299 = scmp.eq.s32.totalorder %s30, 1
      %p300 = scmp.ne.s32.totalorder %s295, %s297
      %p301 = scmp.eq.s32.totalorder %s30, 0
      %p302 = por %p300, %p301
      %p303 = scmp.ne.s32.totalorder %s295, %s297
      %p304 = scmp.eq.s32.totalorder %s35, 1
      %p305 = por %p303, %p304
      %p306 = scmp.ne.s32.totalorder %s297, %s298
      %p307 = scmp.eq.s32.totalorder %s35, 0
      %p308 = por %p306, %p307
      %p309 = scmp.ne.s32.totalorder %s297, %s298
      %p310 = scmp.eq.s32.totalorder %s36, 1
      %p311 = por %p309, %p310
      %p313 = scmp.ne.s32.totalorder %s298, %s312
      %p314 = scmp.eq.s32.totalorder %s36, 0
      %p315 = por %p313, %p314
      %s317 = sadd.s32 %s316, 1
      %p320 = scmp.eq.s32.totalorder %s30, 1
      %p321 = scmp.ne.s32.totalorder %s316, %s318
      %p322 = scmp.eq.s32.totalorder %s30, 0
      %p323 = por %p321, %p322
      %p324 = scmp.ne.s32.totalorder %s316, %s318
      %p325 = scmp.eq.s32.totalorder %s35, 1
      %p326 = por %p324, %p325
      %p327 = scmp.ne.s32.totalorder %s318, %s319
      %p328 = scmp.eq.s32.totalorder %s35, 0
      %p329 = por %p327, %p328
      %p330 = scmp.ne.s32.totalorder %s318, %s319
      %p331 = scmp.eq.s32.totalorder %s36, 1
      %p332 = por %p330, %p331
      %p334 = scmp.ne.s32.totalorder %s319, %s333
      %p335 = scmp.eq.s32.totalorder %s36, 0
      %p336 = por %p334, %p335
      %s338 = sadd.s32 %s337, 1
      %p341 = scmp.eq.s32.totalorder %s30, 1
      %p342 = scmp.ne.s32.totalorder %s337, %s339
      %p343 = scmp.eq.s32.totalorder %s30, 0
      %p344 = por %p342, %p343
      %p345 = scmp.ne.s32.totalorder %s337, %s339
      %p346 = scmp.eq.s32.totalorder %s35, 1
      %p347 = por %p345, %p346
      %p348 = scmp.ne.s32.totalorder %s339, %s340
      %p349 = scmp.eq.s32.totalorder %s35, 0
      %p350 = por %p348, %p349
      %p351 = scmp.ne.s32.totalorder %s339, %s340
      %p352 = scmp.eq.s32.totalorder %s36, 1
      %p353 = por %p351, %p352
      %p355 = scmp.ne.s32.totalorder %s340, %s354
      %p356 = scmp.eq.s32.totalorder %s36, 0
      %p357 = por %p355, %p356
      %s359 = sadd.s32 %s358, 1
      %p362 = scmp.eq.s32.totalorder %s30, 1
      %p363 = scmp.ne.s32.totalorder %s358, %s360
      %p364 = scmp.eq.s32.totalorder %s30, 0
      %p365 = por %p363, %p364
      %p366 = scmp.ne.s32.totalorder %s358, %s360
      %p367 = scmp.eq.s32.totalorder %s35, 1
      %p368 = por %p366, %p367
      %p369 = scmp.ne.s32.totalorder %s360, %s361
      %p370 = scmp.eq.s32.totalorder %s35, 0
      %p371 = por %p369, %p370
      %p372 = scmp.ne.s32.totalorder %s360, %s361
      %p373 = scmp.eq.s32.totalorder %s36, 1
      %p374 = por %p372, %p373
      %p376 = scmp.ne.s32.totalorder %s361, %s375
      %p377 = scmp.eq.s32.totalorder %s36, 0
      %p378 = por %p376, %p377
      %s379 = ssub.s32 %s30, %s37
      %p380 = scmp.eq.s32.totalorder %s379, 0
      %s382 = sadd.s32 %s381, 1
      %s383 = scalar_select %p380, %s381, %s382
      %p386 = pneg %p380
      %p387 = scmp.eq.s32.totalorder %s30, 1
      %p388 = por %p386, %p387
      %p389 = scmp.ne.s32.totalorder %s381, %s384
      %p390 = scmp.eq.s32.totalorder %s30, 0
      %p391 = por %p389, %p390
      %p392 = scmp.ne.s32.totalorder %s381, %s384
      %p393 = scmp.eq.s32.totalorder %s35, 1
      %p394 = por %p392, %p393
      %p395 = scmp.ne.s32.totalorder %s384, %s385
      %p396 = scmp.eq.s32.totalorder %s35, 0
      %p397 = por %p395, %p396
      %p398 = scmp.ne.s32.totalorder %s384, %s385
      %p399 = scmp.eq.s32.totalorder %s36, 1
      %p400 = por %p398, %p399
      %p402 = scmp.ne.s32.totalorder %s385, %s401
      %p403 = scmp.eq.s32.totalorder %s36, 0
      %p404 = por %p402, %p403
      %p405 = scmp.le.s32.totalorder 1, %s30
      %p406 = scmp.lt.s32.totalorder %s30, 3
      %p407 = pnand %p405, %p406
      %p408 = pneg %p407
      // Predicated region
      $region9: #{tpu_custom_call.1} parent=5 // pred_check
        _
      $region10: #{tpu_custom_call.1} parent=5 // pred_check_branch
        %410 = sbr.rel (%p407) target = $region12
      $region11: #{tpu_custom_call.1} parent=5 // pred_region
        %s411 = ssub.s32 %s30, 1
        // Predicated region
        $region13: #{tpu_custom_call.1} parent=11 // pred_check
          %p412 = pneg %p51
        $region14: #{tpu_custom_call.1} parent=11 // pred_check_branch
          %414 = sbr.rel (%p412) target = $region16
        $region15: #{tpu_custom_call.1} parent=11 // pred_region
          %s416 = ssub.s32 256, 256
          %417 = vsyncadd [#allocation3], %s416
          %s418 = sshll.u32 [#allocation2], 4
          %s419 = int_to_ptr.vmem [resolvable:$true] %s418
          %424 = dma.hbm_to_vmem [thread:$0]  %s0, 256, %s419, [#allocation3], 128, 128, 8
        $region16: #{tpu_custom_call.1} parent=11 // pred_fallthru
          _
        // Predicated region
        $region17: #{tpu_custom_call.1} parent=11 // pred_check
          %p425 = pneg %p72
        $region18: #{tpu_custom_call.1} parent=11 // pred_check_branch
          %427 = sbr.rel (%p425) target = $region20
        $region19: #{tpu_custom_call.1} parent=11 // pred_region
          %s429 = ssub.s32 256, 256
          %430 = vsyncadd [#allocation6], %s429
          %s431 = sshll.u32 [#allocation5], 4
          %s432 = int_to_ptr.vmem [resolvable:$true] %s431
          %437 = dma.hbm_to_vmem [thread:$0]  %s1, 256, %s432, [#allocation6], 128, 128, 8
        $region20: #{tpu_custom_call.1} parent=11 // pred_fallthru
          _
        // Predicated region
        $region21: #{tpu_custom_call.1} parent=11 // pred_check
          %p438 = pneg %p119
        $region22: #{tpu_custom_call.1} parent=11 // pred_check_branch
          %440 = sbr.rel (%p438) target = $region24
        $region23: #{tpu_custom_call.1} parent=11 // pred_region
          %s442 = ssub.s32 1024, 1024
          %443 = vsyncadd [#allocation6], %s442
          %s444 = sshll.u32 [#allocation8], 4
          %s445 = int_to_ptr.vmem [resolvable:$true] %s444
          %450 = dma.hbm_to_vmem [thread:$0]  %s3, 1024, %s445, [#allocation6], 64, 64, 4
        $region24: #{tpu_custom_call.1} parent=11 // pred_fallthru
          _
        // Predicated region
        $region25: #{tpu_custom_call.1} parent=11 // pred_check
          %p451 = pneg %p140
        $region26: #{tpu_custom_call.1} parent=11 // pred_check_branch
          %453 = sbr.rel (%p451) target = $region28
        $region27: #{tpu_custom_call.1} parent=11 // pred_region
          _
        $region28: #{tpu_custom_call.1} parent=11 // pred_fallthru
          _
        // Predicated region
        $region29: #{tpu_custom_call.1} parent=11 // pred_check
          %p454 = pneg %p161
        $region30: #{tpu_custom_call.1} parent=11 // pred_check_branch
          %456 = sbr.rel (%p454) target = $region32
        $region31: #{tpu_custom_call.1} parent=11 // pred_region
          %s458 = ssub.s32 1024, 1024
          %459 = vsyncadd [#allocation10], %s458
          %s460 = sshll.u32 [#allocation9], 4
          %s461 = int_to_ptr.vmem [resolvable:$true] %s460
          %466 = dma.hbm_to_vmem [thread:$0]  %s5, 1024, %s461, [#allocation10], 64, 64, 4
        $region32: #{tpu_custom_call.1} parent=11 // pred_fallthru
          _
        // Predicated region
        $region33: #{tpu_custom_call.1} parent=11 // pred_check
          %p467 = pneg %p182
        $region34: #{tpu_custom_call.1} parent=11 // pred_check_branch
          %469 = sbr.rel (%p467) target = $region36
        $region35: #{tpu_custom_call.1} parent=11 // pred_region
          _
        $region36: #{tpu_custom_call.1} parent=11 // pred_fallthru
          _
        // Predicated region
        $region37: #{tpu_custom_call.1} parent=11 // pred_check
          %p470 = pneg %p203
        $region38: #{tpu_custom_call.1} parent=11 // pred_check_branch
          %472 = sbr.rel (%p470) target = $region40
        $region39: #{tpu_custom_call.1} parent=11 // pred_region
          %s474 = ssub.s32 1024, 1024
          %475 = vsyncadd [#allocation10], %s474
          %s476 = sshll.u32 [#allocation11], 4
          %s477 = int_to_ptr.vmem [resolvable:$true] %s476
          %482 = dma.hbm_to_vmem [thread:$0]  %s7, 1024, %s477, [#allocation10], 64, 64, 4
        $region40: #{tpu_custom_call.1} parent=11 // pred_fallthru
          _
        // Predicated region
        $region41: #{tpu_custom_call.1} parent=11 // pred_check
          %p483 = pneg %p224
        $region42: #{tpu_custom_call.1} parent=11 // pred_check_branch
          %485 = sbr.rel (%p483) target = $region44
        $region43: #{tpu_custom_call.1} parent=11 // pred_region
          _
        $region44: #{tpu_custom_call.1} parent=11 // pred_fallthru
          _
        // Predicated region
        $region45: #{tpu_custom_call.1} parent=11 // pred_check
          %p486 = pneg %p245
        $region46: #{tpu_custom_call.1} parent=11 // pred_check_branch
          %488 = sbr.rel (%p486) target = $region48
        $region47: #{tpu_custom_call.1} parent=11 // pred_region
          %s490 = ssub.s32 1024, 1024
          %491 = vsyncadd [#allocation13], %s490
          %s492 = sshll.u32 [#allocation12], 4
          %s493 = int_to_ptr.vmem [resolvable:$true] %s492
          %498 = dma.hbm_to_vmem [thread:$0]  %s9, 1024, %s493, [#allocation13], 64, 64, 4
        $region48: #{tpu_custom_call.1} parent=11 // pred_fallthru
          _
        // Predicated region
        $region49: #{tpu_custom_call.1} parent=11 // pred_check
          %p499 = pneg %p266
        $region50: #{tpu_custom_call.1} parent=11 // pred_check_branch
          %501 = sbr.rel (%p499) target = $region52
        $region51: #{tpu_custom_call.1} parent=11 // pred_region
          _
        $region52: #{tpu_custom_call.1} parent=11 // pred_fallthru
          _
        // Predicated region
        $region53: #{tpu_custom_call.1} parent=11 // pred_check
          %p502 = pneg %p287
        $region54: #{tpu_custom_call.1} parent=11 // pred_check_branch
          %504 = sbr.rel (%p502) target = $region56
        $region55: #{tpu_custom_call.1} parent=11 // pred_region
          %s506 = ssub.s32 1024, 1024
          %507 = vsyncadd [#allocation13], %s506
          %s508 = sshll.u32 [#allocation14], 4
          %s509 = int_to_ptr.vmem [resolvable:$true] %s508
          %514 = dma.hbm_to_vmem [thread:$0]  %s11, 1024, %s509, [#allocation13], 64, 64, 4
        $region56: #{tpu_custom_call.1} parent=11 // pred_fallthru
          _
        // Predicated region
        $region57: #{tpu_custom_call.1} parent=11 // pred_check
          %p515 = pneg %p308
        $region58: #{tpu_custom_call.1} parent=11 // pred_check_branch
          %517 = sbr.rel (%p515) target = $region60
        $region59: #{tpu_custom_call.1} parent=11 // pred_region
          _
        $region60: #{tpu_custom_call.1} parent=11 // pred_fallthru
          _
        // Predicated region
        $region61: #{tpu_custom_call.1} parent=11 // pred_check
          %p518 = pneg %p329
        $region62: #{tpu_custom_call.1} parent=11 // pred_check_branch
          %520 = sbr.rel (%p518) target = $region64
        $region63: #{tpu_custom_call.1} parent=11 // pred_region
          _
        $region64: #{tpu_custom_call.1} parent=11 // pred_fallthru
          _
        // Predicated region
        $region65: #{tpu_custom_call.1} parent=11 // pred_check
          %p521 = pneg %p350
        $region66: #{tpu_custom_call.1} parent=11 // pred_check_branch
          %523 = sbr.rel (%p521) target = $region68
        $region67: #{tpu_custom_call.1} parent=11 // pred_region
          %s525 = ssub.s32 1024, 1024
          %526 = vsyncadd [#allocation16], %s525
          %s527 = sshll.u32 [#allocation15], 4
          %s528 = int_to_ptr.vmem [resolvable:$true] %s527
          %533 = dma.hbm_to_vmem [thread:$0]  %s14, 1024, %s528, [#allocation16], 64, 64, 4
        $region68: #{tpu_custom_call.1} parent=11 // pred_fallthru
          _
        // Predicated region
        $region69: #{tpu_custom_call.1} parent=11 // pred_check
          %p534 = pneg %p371
        $region70: #{tpu_custom_call.1} parent=11 // pred_check_branch
          %536 = sbr.rel (%p534) target = $region72
        $region71: #{tpu_custom_call.1} parent=11 // pred_region
          _
        $region72: #{tpu_custom_call.1} parent=11 // pred_fallthru
          _
      $region12: #{tpu_custom_call.1} parent=5 // pred_fallthru
        _
      %p537 = scmp.lt.s32.totalorder %s30, 2
      // Predicated region
      $region73: #{tpu_custom_call.1} parent=5 // pred_check
        %p538 = pneg %p537
      $region74: #{tpu_custom_call.1} parent=5 // pred_check_branch
        %540 = sbr.rel (%p538) target = $region76
      $region75: #{tpu_custom_call.1} parent=5 // pred_region
        // Predicated region
        $region77: #{tpu_custom_call.1} parent=75 // pred_check
          %p541 = pneg %p92
        $region78: #{tpu_custom_call.1} parent=75 // pred_check_branch
          %543 = sbr.rel (%p541) target = $region80
        $region79: #{tpu_custom_call.1} parent=75 // pred_region
          %s544 = sand.u32 %s30, 1
          %s545 = scalar_lea.sflag [#allocation3], %s544
          %s546 = sand.u32 %s82, 1
          %s547 = smul.addr %s546, 16
          %s548 = scalar_lea.vmem [#allocation7], %s547
          %s550 = ssub.s32 256, 256
          %551 = vsyncadd %s545, %s550
          %s552 = smul.addr %s30, 2
          %s553 = smul.addr %s552, 128
          %s554 = scalar_lea.hbm %s2, %s553
          %s555 = sshll.u32 %s548, 4
          %s556 = int_to_ptr.vmem [resolvable:$true] %s555
          %561 = dma.hbm_to_vmem [thread:$0]  %s554, 256, %s556, %s545, 128, 128, 8
        $region80: #{tpu_custom_call.1} parent=75 // pred_fallthru
          _
      $region76: #{tpu_custom_call.1} parent=5 // pred_fallthru
        _
      %p562 = scmp.le.s32.totalorder 1, %s30
      %p563 = scmp.lt.s32.totalorder %s30, 3
      %p564 = pnand %p562, %p563
      %p565 = pneg %p564
      // Predicated region
      $region81: #{tpu_custom_call.1} parent=5 // pred_check
        _
      $region82: #{tpu_custom_call.1} parent=5 // pred_check_branch
        %567 = sbr.rel (%p564) target = $region84
      $region83: #{tpu_custom_call.1} parent=5 // pred_region
        %s568 = ssub.s32 %s30, 1
        // Predicated region
        $region85: #{tpu_custom_call.1} parent=83 // pred_check
          %p569 = pneg %p51
        $region86: #{tpu_custom_call.1} parent=83 // pred_check_branch
          %571 = sbr.rel (%p569) target = $region88
        $region87: #{tpu_custom_call.1} parent=83 // pred_region
          %572 = dma.done [#allocation3], 256
        $region88: #{tpu_custom_call.1} parent=83 // pred_fallthru
          _
        // Predicated region
        $region89: #{tpu_custom_call.1} parent=83 // pred_check
          %p573 = pneg %p72
        $region90: #{tpu_custom_call.1} parent=83 // pred_check_branch
          %575 = sbr.rel (%p573) target = $region92
        $region91: #{tpu_custom_call.1} parent=83 // pred_region
          %576 = dma.done [#allocation6], 256
        $region92: #{tpu_custom_call.1} parent=83 // pred_fallthru
          _
        %s577 = sand.u32 %s35, 1
        %s578 = scalar_lea.sflag [#allocation3], %s577
        %s579 = sand.u32 %s85, 1
        %s580 = smul.addr %s579, 16
        %s581 = scalar_lea.vmem [#allocation7], %s580
        // Predicated region
        $region93: #{tpu_custom_call.1} parent=83 // pred_check
          %p582 = pneg %p98
        $region94: #{tpu_custom_call.1} parent=83 // pred_check_branch
          %584 = sbr.rel (%p582) target = $region96
        $region95: #{tpu_custom_call.1} parent=83 // pred_region
          %585 = dma.done %s578, 256
        $region96: #{tpu_custom_call.1} parent=83 // pred_fallthru
          _
        // Predicated region
        $region97: #{tpu_custom_call.1} parent=83 // pred_check
          %p586 = pneg %p119
        $region98: #{tpu_custom_call.1} parent=83 // pred_check_branch
          %588 = sbr.rel (%p586) target = $region100
        $region99: #{tpu_custom_call.1} parent=83 // pred_region
          %589 = dma.done [#allocation6], 1024
        $region100: #{tpu_custom_call.1} parent=83 // pred_fallthru
          _
        // Predicated region
        $region101: #{tpu_custom_call.1} parent=83 // pred_check
          %p590 = pneg %p161
        $region102: #{tpu_custom_call.1} parent=83 // pred_check_branch
          %592 = sbr.rel (%p590) target = $region104
        $region103: #{tpu_custom_call.1} parent=83 // pred_region
          %593 = dma.done [#allocation10], 1024
        $region104: #{tpu_custom_call.1} parent=83 // pred_fallthru
          _
        // Predicated region
        $region105: #{tpu_custom_call.1} parent=83 // pred_check
          %p594 = pneg %p203
        $region106: #{tpu_custom_call.1} parent=83 // pred_check_branch
          %596 = sbr.rel (%p594) target = $region108
        $region107: #{tpu_custom_call.1} parent=83 // pred_region
          %597 = dma.done [#allocation10], 1024
        $region108: #{tpu_custom_call.1} parent=83 // pred_fallthru
          _
        // Predicated region
        $region109: #{tpu_custom_call.1} parent=83 // pred_check
          %p598 = pneg %p245
        $region110: #{tpu_custom_call.1} parent=83 // pred_check_branch
          %600 = sbr.rel (%p598) target = $region112
        $region111: #{tpu_custom_call.1} parent=83 // pred_region
          %601 = dma.done [#allocation13], 1024
        $region112: #{tpu_custom_call.1} parent=83 // pred_fallthru
          _
        // Predicated region
        $region113: #{tpu_custom_call.1} parent=83 // pred_check
          %p602 = pneg %p287
        $region114: #{tpu_custom_call.1} parent=83 // pred_check_branch
          %604 = sbr.rel (%p602) target = $region116
        $region115: #{tpu_custom_call.1} parent=83 // pred_region
          %605 = dma.done [#allocation13], 1024
        $region116: #{tpu_custom_call.1} parent=83 // pred_fallthru
          _
        // Predicated region
        $region117: #{tpu_custom_call.1} parent=83 // pred_check
          %p606 = pneg %p350
        $region118: #{tpu_custom_call.1} parent=83 // pred_check_branch
          %608 = sbr.rel (%p606) target = $region120
        $region119: #{tpu_custom_call.1} parent=83 // pred_region
          %609 = dma.done [#allocation16], 1024
        $region120: #{tpu_custom_call.1} parent=83 // pred_fallthru
          _
        %p610 = pneg %p51
        %p611 = pneg %p48
        %p612 = pneg %p72
        %p613 = pneg %p69
        %s614 = sand.u32 %s35, 1
        %s615 = scalar_lea.sflag [#allocation3], %s614
        %s616 = sand.u32 %s85, 1
        %s617 = smul.addr %s616, 16
        %s618 = scalar_lea.vmem [#allocation7], %s617
        %p619 = pneg %p98
        %p620 = pneg %p95
        %p621 = pneg %p119
        %p622 = pneg %p116
        %p623 = pneg %p140
        %p624 = pneg %p137
        %p625 = pneg %p161
        %p626 = pneg %p158
        %p627 = pneg %p182
        %p628 = pneg %p179
        %p629 = pneg %p203
        %p630 = pneg %p200
        %p631 = pneg %p224
        %p632 = pneg %p221
        %p633 = pneg %p245
        %p634 = pneg %p242
        %p635 = pneg %p266
        %p636 = pneg %p263
        %p637 = pneg %p287
        %p638 = pneg %p284
        %p639 = pneg %p308
        %p640 = pneg %p305
        %p641 = pneg %p329
        %p642 = pneg %p326
        %p643 = pneg %p350
        %p644 = pneg %p347
        %p645 = pneg %p371
        %p646 = pneg %p368
        %p647 = pneg %p397
        %p648 = pneg %p394
        %s649 = sand.u32 %s384, 1
        %s650 = scalar_lea.sflag [#allocation4], %s649
        %s651 = sand.u32 %s384, 1
        %s652 = smul.addr %s651, 8
        %s653 = scalar_lea.vmem [#allocation17], %s652
        %v655 = vld [vmem:[#allocation2] sm:$0xff]
        %v656 = vld [vmem:[#allocation2 + $0x8] sm:$0xff]
        %v657 = vld [vmem:[#allocation5] sm:$0xff]
        %v658 = vld [vmem:[#allocation5 + $0x8] sm:$0xff]
        %v659 = vld [vmem:[%s581] sm:$0xff]
        %v660 = vld [vmem:[%s581 + $0x8] sm:$0xff]
        %vm661 = vcmask 130048
        %v663 = vsel %vm661, %v655, 0
        %v666 = vsel %vm661, %v656, 0
        %668 = vmatprep.subr.mxu0 0.0
        %669 = vmatpush1.msra.mxu0 0.0
        %670 = vmatprep.subr.mxu0 0.0
        %671 = vmatpush1.msra.mxu0 0.0
        %672 = vmatprep.subr.mxu0 0.0
        %673 = vmatpush1.msra.mxu0 0.0
        %674 = vmatprep.subr.mxu0 0.0
        %675 = vmatpush1.msra.mxu0 0.0
        %676 = vmatprep.subr.mxu0 0.0
        %677 = vmatpush1.msra.mxu0 0.0
        %678 = vmatprep.subr.mxu0 0.0
        %679 = vmatpush1.msra.mxu0 0.0
        %680 = vmatprep.subr.mxu0 0.0
        %681 = vmatpush1.msra.mxu0 0.0
        %682 = vmatprep.subr.mxu0 0.0
        %683 = vmatpush1.msra.mxu0 0.0
        %684 = vmatprep.subr.mxu0 0.0
        %685 = vmatpush1.msra.mxu0 0.0
        %686 = vmatprep.subr.mxu0 0.0
        %687 = vmatpush1.msra.mxu0 0.0
        %688 = vmatprep.subr.mxu0 0.0
        %689 = vmatpush1.msra.mxu0 0.0
        %690 = vmatprep.subr.mxu0 0.0
        %691 = vmatpush1.msra.mxu0 0.0
        %692 = vmatprep.subr.mxu0 0.0
        %693 = vmatpush1.msra.mxu0 0.0
        %694 = vmatprep.subr.mxu0 0.0
        %695 = vmatpush1.msra.mxu0 0.0
        %696 = vmatprep.subr.mxu0 0.0
        %697 = vmatpush1.msra.mxu0 %v660
        %698 = vmatprep.subr.mxu0 0.0
        %699 = vmatpush1.msra.mxu0 %v659
        %700 = vmatprep.subr.mxu0 0.0
        %701 = vmatpush2.msra.mxu0 0.0
        %702 = vmatprep.subr.mxu0 0.0
        %703 = vmatpush2.msra.mxu0 0.0
        %704 = vmatprep.subr.mxu0 0.0
        %705 = vmatpush2.msra.mxu0 0.0
        %706 = vmatprep.subr.mxu0 0.0
        %707 = vmatpush2.msra.mxu0 0.0
        %708 = vmatprep.subr.mxu0 0.0
        %709 = vmatpush2.msra.mxu0 0.0
        %710 = vmatprep.subr.mxu0 0.0
        %711 = vmatpush2.msra.mxu0 0.0
        %712 = vmatprep.subr.mxu0 0.0
        %713 = vmatpush2.msra.mxu0 0.0
        %714 = vmatprep.subr.mxu0 0.0
        %715 = vmatpush2.msra.mxu0 0.0
        %716 = vmatprep.subr.mxu0 0.0
        %717 = vmatpush2.msra.mxu0 0.0
        %718 = vmatprep.subr.mxu0 0.0
        %719 = vmatpush2.msra.mxu0 0.0
        %720 = vmatprep.subr.mxu0 0.0
        %721 = vmatpush2.msra.mxu0 0.0
        %722 = vmatprep.subr.mxu0 0.0
        %723 = vmatpush2.msra.mxu0 0.0
        %724 = vmatprep.subr.mxu0 0.0
        %725 = vmatpush2.msra.mxu0 0.0
        %726 = vmatprep.subr.mxu0 0.0
        %727 = vmatpush2.msra.mxu0 0.0
        %728 = vmatprep.subr.mxu0 0.0
        %729 = vmatpush2.msra.mxu0 0.0
        %730 = vmatprep.subr.mxu0 0.0
        %731 = vmatpush2.msra.mxu0 0.0
        %732 = vmatprep.mubr.f32.mxu0 0.0
        %733 = vmatmul.mubr.f32.gmra.mxu0 %v663
        %v734 = vpop.f32.mrf.mxu0
        %v735 = vadd.f32 0.0, %v734
        %v736 = vpop.f32.mrf.mxu0
        %737 = vmatprep.mubr.f32.mxu0 0.0
        %738 = vmatmul.mubr.f32.gmra.mxu0 %v666
        %v739 = vpop.f32.mrf.mxu0
        %v740 = vadd.f32 0.0, %v739
        %v741 = vpop.f32.mrf.mxu0
        %742 = vdwg.mxu0
        %v743 = vpack.c.bf16 %v740, %v735
        %v744 = vld [vmem:[#allocation8] sm:$0xf]
        %v745 = vld [vmem:[#allocation8 + $0x4] sm:$0xf]
        %v746 = vld [vmem:[#allocation8 + $0x8] sm:$0xf]
        %v747 = vld [vmem:[#allocation8 + $0xc] sm:$0xf]
        %v748 = vld [vmem:[#allocation8 + $0x10] sm:$0xf]
        %v749 = vld [vmem:[#allocation8 + $0x14] sm:$0xf]
        %v750 = vld [vmem:[#allocation8 + $0x18] sm:$0xf]
        %v751 = vld [vmem:[#allocation8 + $0x1c] sm:$0xf]
        %v752 = vld [vmem:[#allocation8 + $0x20] sm:$0xf]
        %v753 = vld [vmem:[#allocation8 + $0x24] sm:$0xf]
        %v754 = vld [vmem:[#allocation8 + $0x28] sm:$0xf]
        %v755 = vld [vmem:[#allocation8 + $0x2c] sm:$0xf]
        %v756 = vld [vmem:[#allocation8 + $0x30] sm:$0xf]
        %v757 = vld [vmem:[#allocation8 + $0x34] sm:$0xf]
        %v758 = vld [vmem:[#allocation8 + $0x38] sm:$0xf]
        %v759 = vld [vmem:[#allocation8 + $0x3c] sm:$0xf]
        %v760 = vld [vmem:[%s4] sm:$0x1]
        %v762 = vlaneseq
        %v763 = vshrl.u32 %v762, 7
        %v764 = vsub.s32 0, %v763
        %v765 = vrot.slane %v760, %v764
        %v783 = vunpack.c.l.b16 %v744
        %v784 = vunpack.c.l.b16 %v745
        %v785 = vunpack.c.l.b16 %v746
        %v786 = vunpack.c.l.b16 %v747
        %v787 = vunpack.c.l.b16 %v748
        %v788 = vunpack.c.l.b16 %v749
        %v789 = vunpack.c.l.b16 %v750
        %v790 = vunpack.c.l.b16 %v751
        %v791 = vunpack.c.l.b16 %v752
        %v792 = vunpack.c.l.b16 %v753
        %v793 = vunpack.c.l.b16 %v754
        %v794 = vunpack.c.l.b16 %v755
        %v795 = vunpack.c.l.b16 %v756
        %v796 = vunpack.c.l.b16 %v757
        %v797 = vunpack.c.l.b16 %v758
        %v798 = vunpack.c.l.b16 %v759
        %v799 = vpack.c.b16 %v784, %v783
        %v800 = vpack.c.b16 %v786, %v785
        %v801 = vpack.c.b16 %v788, %v787
        %v802 = vpack.c.b16 %v790, %v789
        %v803 = vpack.c.b16 %v792, %v791
        %v804 = vpack.c.b16 %v794, %v793
        %v805 = vpack.c.b16 %v796, %v795
        %v806 = vpack.c.b16 %v798, %v797
        %815 = vmatprep.subr.bf16.mxu0 0
        %816 = vmatpush1.bf16.msra.mxu0 %v806
        %817 = vmatprep.subr.bf16.mxu0 0
        %818 = vmatpush1.bf16.msra.mxu0 %v805
        %819 = vmatprep.subr.bf16.mxu0 0
        %820 = vmatpush1.bf16.msra.mxu0 %v804
        %821 = vmatprep.subr.bf16.mxu0 0
        %822 = vmatpush1.bf16.msra.mxu0 %v803
        %823 = vmatprep.subr.bf16.mxu0 0
        %824 = vmatpush1.bf16.msra.mxu0 %v802
        %825 = vmatprep.subr.bf16.mxu0 0
        %826 = vmatpush1.bf16.msra.mxu0 %v801
        %827 = vmatprep.subr.bf16.mxu0 0
        %828 = vmatpush1.bf16.msra.mxu0 %v800
        %829 = vmatprep.subr.bf16.mxu0 0
        %830 = vmatpush1.bf16.msra.mxu0 %v799
        %831 = vmatprep.subr.bf16.mxu0 0
        %832 = vmatpush2.bf16.msra.mxu0 0
        %833 = vmatprep.subr.bf16.mxu0 0
        %834 = vmatpush2.bf16.msra.mxu0 0
        %835 = vmatprep.subr.bf16.mxu0 0
        %836 = vmatpush2.bf16.msra.mxu0 0
        %837 = vmatprep.subr.bf16.mxu0 0
        %838 = vmatpush2.bf16.msra.mxu0 0
        %839 = vmatprep.subr.bf16.mxu0 0
        %840 = vmatpush2.bf16.msra.mxu0 0
        %841 = vmatprep.subr.bf16.mxu0 0
        %842 = vmatpush2.bf16.msra.mxu0 0
        %843 = vmatprep.subr.bf16.mxu0 0
        %844 = vmatpush2.bf16.msra.mxu0 0
        %845 = vmatprep.subr.bf16.mxu0 0
        %846 = vmatpush2.bf16.msra.mxu0 0
        %847 = vmatprep.mubr.bf16.mxu0 0
        %848 = vmatmul.mubr.bf16.gmra.mxu0 %v743
        %v849 = vpop.f32.mrf.mxu0
        %v850 = vadd.f32 %v765, %v849
        %v851 = vpop.f32.mrf.mxu0
        %v852 = vpop.f32.mrf.mxu0
        %v853 = vadd.f32 %v765, %v852
        %v854 = vpop.f32.mrf.mxu0
        %855 = vdwg.mxu0
        %v856 = vmax.f32 %v850, 0.0
        %v857 = vmax.f32 %v853, 0.0
        %v858 = vpack.c.bf16 %v857, %v856
        %v859 = vld [vmem:[#allocation9] sm:$0xf]
        %v860 = vld [vmem:[#allocation9 + $0x4] sm:$0xf]
        %v861 = vld [vmem:[#allocation9 + $0x8] sm:$0xf]
        %v862 = vld [vmem:[#allocation9 + $0xc] sm:$0xf]
        %v863 = vld [vmem:[#allocation9 + $0x10] sm:$0xf]
        %v864 = vld [vmem:[#allocation9 + $0x14] sm:$0xf]
        %v865 = vld [vmem:[#allocation9 + $0x18] sm:$0xf]
        %v866 = vld [vmem:[#allocation9 + $0x1c] sm:$0xf]
        %v867 = vld [vmem:[#allocation9 + $0x20] sm:$0xf]
        %v868 = vld [vmem:[#allocation9 + $0x24] sm:$0xf]
        %v869 = vld [vmem:[#allocation9 + $0x28] sm:$0xf]
        %v870 = vld [vmem:[#allocation9 + $0x2c] sm:$0xf]
        %v871 = vld [vmem:[#allocation9 + $0x30] sm:$0xf]
        %v872 = vld [vmem:[#allocation9 + $0x34] sm:$0xf]
        %v873 = vld [vmem:[#allocation9 + $0x38] sm:$0xf]
        %v874 = vld [vmem:[#allocation9 + $0x3c] sm:$0xf]
        %v875 = vld [vmem:[%s6] sm:$0x1]
        %v877 = vlaneseq
        %v878 = vshrl.u32 %v877, 7
        %v879 = vsub.s32 0, %v878
        %v880 = vrot.slane %v875, %v879
        %v898 = vunpack.c.l.b16 %v859
        %v899 = vunpack.c.l.b16 %v860
        %v900 = vunpack.c.l.b16 %v861
        %v901 = vunpack.c.l.b16 %v862
        %v902 = vunpack.c.l.b16 %v863
        %v903 = vunpack.c.l.b16 %v864
        %v904 = vunpack.c.l.b16 %v865
        %v905 = vunpack.c.l.b16 %v866
        %v906 = vunpack.c.l.b16 %v867
        %v907 = vunpack.c.l.b16 %v868
        %v908 = vunpack.c.l.b16 %v869
        %v909 = vunpack.c.l.b16 %v870
        %v910 = vunpack.c.l.b16 %v871
        %v911 = vunpack.c.l.b16 %v872
        %v912 = vunpack.c.l.b16 %v873
        %v913 = vunpack.c.l.b16 %v874
        %v914 = vpack.c.b16 %v899, %v898
        %v915 = vpack.c.b16 %v901, %v900
        %v916 = vpack.c.b16 %v903, %v902
        %v917 = vpack.c.b16 %v905, %v904
        %v918 = vpack.c.b16 %v907, %v906
        %v919 = vpack.c.b16 %v909, %v908
        %v920 = vpack.c.b16 %v911, %v910
        %v921 = vpack.c.b16 %v913, %v912
        %930 = vmatprep.subr.bf16.mxu0 0
        %931 = vmatpush1.bf16.msra.mxu0 %v921
        %932 = vmatprep.subr.bf16.mxu0 0
        %933 = vmatpush1.bf16.msra.mxu0 %v920
        %934 = vmatprep.subr.bf16.mxu0 0
        %935 = vmatpush1.bf16.msra.mxu0 %v919
        %936 = vmatprep.subr.bf16.mxu0 0
        %937 = vmatpush1.bf16.msra.mxu0 %v918
        %938 = vmatprep.subr.bf16.mxu0 0
        %939 = vmatpush1.bf16.msra.mxu0 %v917
        %940 = vmatprep.subr.bf16.mxu0 0
        %941 = vmatpush1.bf16.msra.mxu0 %v916
        %942 = vmatprep.subr.bf16.mxu0 0
        %943 = vmatpush1.bf16.msra.mxu0 %v915
        %944 = vmatprep.subr.bf16.mxu0 0
        %945 = vmatpush1.bf16.msra.mxu0 %v914
        %946 = vmatprep.subr.bf16.mxu0 0
        %947 = vmatpush2.bf16.msra.mxu0 0
        %948 = vmatprep.subr.bf16.mxu0 0
        %949 = vmatpush2.bf16.msra.mxu0 0
        %950 = vmatprep.subr.bf16.mxu0 0
        %951 = vmatpush2.bf16.msra.mxu0 0
        %952 = vmatprep.subr.bf16.mxu0 0
        %953 = vmatpush2.bf16.msra.mxu0 0
        %954 = vmatprep.subr.bf16.mxu0 0
        %955 = vmatpush2.bf16.msra.mxu0 0
        %956 = vmatprep.subr.bf16.mxu0 0
        %957 = vmatpush2.bf16.msra.mxu0 0
        %958 = vmatprep.subr.bf16.mxu0 0
        %959 = vmatpush2.bf16.msra.mxu0 0
        %960 = vmatprep.subr.bf16.mxu0 0
        %961 = vmatpush2.bf16.msra.mxu0 0
        %962 = vmatprep.mubr.bf16.mxu0 0
        %963 = vmatmul.mubr.bf16.gmra.mxu0 %v858
        %v964 = vpop.f32.mrf.mxu0
        %v965 = vadd.f32 %v880, %v964
        %v966 = vpop.f32.mrf.mxu0
        %v967 = vpop.f32.mrf.mxu0
        %v968 = vadd.f32 %v880, %v967
        %v969 = vpop.f32.mrf.mxu0
        %970 = vdwg.mxu0
        %v972 = vsel %vm661, %v657, 0
        %v975 = vsel %vm661, %v658, 0
        %977 = vmatprep.subr.mxu0 0.0
        %978 = vmatpush1.msra.mxu0 0.0
        %979 = vmatprep.subr.mxu0 0.0
        %980 = vmatpush1.msra.mxu0 0.0
        %981 = vmatprep.subr.mxu0 0.0
        %982 = vmatpush1.msra.mxu0 0.0
        %983 = vmatprep.subr.mxu0 0.0
        %984 = vmatpush1.msra.mxu0 0.0
        %985 = vmatprep.subr.mxu0 0.0
        %986 = vmatpush1.msra.mxu0 0.0
        %987 = vmatprep.subr.mxu0 0.0
        %988 = vmatpush1.msra.mxu0 0.0
        %989 = vmatprep.subr.mxu0 0.0
        %990 = vmatpush1.msra.mxu0 0.0
        %991 = vmatprep.subr.mxu0 0.0
        %992 = vmatpush1.msra.mxu0 0.0
        %993 = vmatprep.subr.mxu0 0.0
        %994 = vmatpush1.msra.mxu0 0.0
        %995 = vmatprep.subr.mxu0 0.0
        %996 = vmatpush1.msra.mxu0 0.0
        %997 = vmatprep.subr.mxu0 0.0
        %998 = vmatpush1.msra.mxu0 0.0
        %999 = vmatprep.subr.mxu0 0.0
        %1000 = vmatpush1.msra.mxu0 0.0
        %1001 = vmatprep.subr.mxu0 0.0
        %1002 = vmatpush1.msra.mxu0 0.0
        %1003 = vmatprep.subr.mxu0 0.0
        %1004 = vmatpush1.msra.mxu0 0.0
        %1005 = vmatprep.subr.mxu0 0.0
        %1006 = vmatpush1.msra.mxu0 %v968
        %1007 = vmatprep.subr.mxu0 0.0
        %1008 = vmatpush1.msra.mxu0 %v965
        %1009 = vmatprep.subr.mxu0 0.0
        %1010 = vmatpush2.msra.mxu0 0.0
        %1011 = vmatprep.subr.mxu0 0.0
        %1012 = vmatpush2.msra.mxu0 0.0
        %1013 = vmatprep.subr.mxu0 0.0
        %1014 = vmatpush2.msra.mxu0 0.0
        %1015 = vmatprep.subr.mxu0 0.0
        %1016 = vmatpush2.msra.mxu0 0.0
        %1017 = vmatprep.subr.mxu0 0.0
        %1018 = vmatpush2.msra.mxu0 0.0
        %1019 = vmatprep.subr.mxu0 0.0
        %1020 = vmatpush2.msra.mxu0 0.0
        %1021 = vmatprep.subr.mxu0 0.0
        %1022 = vmatpush2.msra.mxu0 0.0
        %1023 = vmatprep.subr.mxu0 0.0
        %1024 = vmatpush2.msra.mxu0 0.0
        %1025 = vmatprep.subr.mxu0 0.0
        %1026 = vmatpush2.msra.mxu0 0.0
        %1027 = vmatprep.subr.mxu0 0.0
        %1028 = vmatpush2.msra.mxu0 0.0
        %1029 = vmatprep.subr.mxu0 0.0
        %1030 = vmatpush2.msra.mxu0 0.0
        %1031 = vmatprep.subr.mxu0 0.0
        %1032 = vmatpush2.msra.mxu0 0.0
        %1033 = vmatprep.subr.mxu0 0.0
        %1034 = vmatpush2.msra.mxu0 0.0
        %1035 = vmatprep.subr.mxu0 0.0
        %1036 = vmatpush2.msra.mxu0 0.0
        %1037 = vmatprep.subr.mxu0 0.0
        %1038 = vmatpush2.msra.mxu0 0.0
        %1039 = vmatprep.subr.mxu0 0.0
        %1040 = vmatpush2.msra.mxu0 0.0
        %1041 = vmatprep.mubr.f32.mxu0 0.0
        %1042 = vmatmul.mubr.f32.gmra.mxu0 %v972
        %v1043 = vpop.f32.mrf.mxu0
        %v1044 = vadd.f32 0.0, %v1043
        %v1045 = vpop.f32.mrf.mxu0
        %1046 = vmatprep.mubr.f32.mxu0 0.0
        %1047 = vmatmul.mubr.f32.gmra.mxu0 %v975
        %v1048 = vpop.f32.mrf.mxu0
        %v1049 = vadd.f32 0.0, %v1048
        %v1050 = vpop.f32.mrf.mxu0
        %1051 = vdwg.mxu0
        %v1052 = vmax.f32 %v1044, 0.0
        %v1053 = vmax.f32 %v1049, 0.0
        %1054 = vmatprep.subr.mxu0 0.0
        %1055 = vmatpush1.msra.mxu0 0.0
        %1056 = vmatprep.subr.mxu0 0.0
        %1057 = vmatpush1.msra.mxu0 0.0
        %1058 = vmatprep.subr.mxu0 0.0
        %1059 = vmatpush1.msra.mxu0 0.0
        %1060 = vmatprep.subr.mxu0 0.0
        %1061 = vmatpush1.msra.mxu0 0.0
        %1062 = vmatprep.subr.mxu0 0.0
        %1063 = vmatpush1.msra.mxu0 0.0
        %1064 = vmatprep.subr.mxu0 0.0
        %1065 = vmatpush1.msra.mxu0 0.0
        %1066 = vmatprep.subr.mxu0 0.0
        %1067 = vmatpush1.msra.mxu0 0.0
        %1068 = vmatprep.subr.mxu0 0.0
        %1069 = vmatpush1.msra.mxu0 0.0
        %1070 = vmatprep.subr.mxu0 0.0
        %1071 = vmatpush1.msra.mxu0 0.0
        %1072 = vmatprep.subr.mxu0 0.0
        %1073 = vmatpush1.msra.mxu0 0.0
        %1074 = vmatprep.subr.mxu0 0.0
        %1075 = vmatpush1.msra.mxu0 0.0
        %1076 = vmatprep.subr.mxu0 0.0
        %1077 = vmatpush1.msra.mxu0 0.0
        %1078 = vmatprep.subr.mxu0 0.0
        %1079 = vmatpush1.msra.mxu0 0.0
        %1080 = vmatprep.subr.mxu0 0.0
        %1081 = vmatpush1.msra.mxu0 0.0
        %1082 = vmatprep.subr.mxu0 0.0
        %1083 = vmatpush1.msra.mxu0 %v1053
        %1084 = vmatprep.subr.mxu0 0.0
        %1085 = vmatpush1.msra.mxu0 %v1052
        %1086 = vmatprep.subr.mxu0 0.0
        %1087 = vmatpush2.msra.mxu0 0.0
        %1088 = vmatprep.subr.mxu0 0.0
        %1089 = vmatpush2.msra.mxu0 0.0
        %1090 = vmatprep.subr.mxu0 0.0
        %1091 = vmatpush2.msra.mxu0 0.0
        %1092 = vmatprep.subr.mxu0 0.0
        %1093 = vmatpush2.msra.mxu0 0.0
        %1094 = vmatprep.subr.mxu0 0.0
        %1095 = vmatpush2.msra.mxu0 0.0
        %1096 = vmatprep.subr.mxu0 0.0
        %1097 = vmatpush2.msra.mxu0 0.0
        %1098 = vmatprep.subr.mxu0 0.0
        %1099 = vmatpush2.msra.mxu0 0.0
        %1100 = vmatprep.subr.mxu0 0.0
        %1101 = vmatpush2.msra.mxu0 0.0
        %1102 = vmatprep.subr.mxu0 0.0
        %1103 = vmatpush2.msra.mxu0 0.0
        %1104 = vmatprep.subr.mxu0 0.0
        %1105 = vmatpush2.msra.mxu0 0.0
        %1106 = vmatprep.subr.mxu0 0.0
        %1107 = vmatpush2.msra.mxu0 0.0
        %1108 = vmatprep.subr.mxu0 0.0
        %1109 = vmatpush2.msra.mxu0 0.0
        %1110 = vmatprep.subr.mxu0 0.0
        %1111 = vmatpush2.msra.mxu0 0.0
        %1112 = vmatprep.subr.mxu0 0.0
        %1113 = vmatpush2.msra.mxu0 0.0
        %1114 = vmatprep.subr.mxu0 0.0
        %1115 = vmatpush2.msra.mxu0 0.0
        %1116 = vmatprep.subr.mxu0 0.0
        %1117 = vmatpush2.msra.mxu0 0.0
        %1118 = vmatprep.mubr.f32.mxu0 0.0
        %1119 = vmatmul.mubr.f32.gmra.mxu0 %v663
        %v1120 = vpop.f32.mrf.mxu0
        %v1121 = vadd.f32 0.0, %v1120
        %v1122 = vpop.f32.mrf.mxu0
        %1123 = vmatprep.mubr.f32.mxu0 0.0
        %1124 = vmatmul.mubr.f32.gmra.mxu0 %v666
        %v1125 = vpop.f32.mrf.mxu0
        %v1126 = vadd.f32 0.0, %v1125
        %v1127 = vpop.f32.mrf.mxu0
        %1128 = vdwg.mxu0
        %v1129 = vpack.c.bf16 %v1126, %v1121
        %v1130 = vld [vmem:[#allocation11] sm:$0xf]
        %v1131 = vld [vmem:[#allocation11 + $0x4] sm:$0xf]
        %v1132 = vld [vmem:[#allocation11 + $0x8] sm:$0xf]
        %v1133 = vld [vmem:[#allocation11 + $0xc] sm:$0xf]
        %v1134 = vld [vmem:[#allocation11 + $0x10] sm:$0xf]
        %v1135 = vld [vmem:[#allocation11 + $0x14] sm:$0xf]
        %v1136 = vld [vmem:[#allocation11 + $0x18] sm:$0xf]
        %v1137 = vld [vmem:[#allocation11 + $0x1c] sm:$0xf]
        %v1138 = vld [vmem:[#allocation11 + $0x20] sm:$0xf]
        %v1139 = vld [vmem:[#allocation11 + $0x24] sm:$0xf]
        %v1140 = vld [vmem:[#allocation11 + $0x28] sm:$0xf]
        %v1141 = vld [vmem:[#allocation11 + $0x2c] sm:$0xf]
        %v1142 = vld [vmem:[#allocation11 + $0x30] sm:$0xf]
        %v1143 = vld [vmem:[#allocation11 + $0x34] sm:$0xf]
        %v1144 = vld [vmem:[#allocation11 + $0x38] sm:$0xf]
        %v1145 = vld [vmem:[#allocation11 + $0x3c] sm:$0xf]
        %v1146 = vld [vmem:[%s8] sm:$0x1]
        %v1148 = vlaneseq
        %v1149 = vshrl.u32 %v1148, 7
        %v1150 = vsub.s32 0, %v1149
        %v1151 = vrot.slane %v1146, %v1150
        %v1169 = vunpack.c.l.b16 %v1130
        %v1170 = vunpack.c.l.b16 %v1131
        %v1171 = vunpack.c.l.b16 %v1132
        %v1172 = vunpack.c.l.b16 %v1133
        %v1173 = vunpack.c.l.b16 %v1134
        %v1174 = vunpack.c.l.b16 %v1135
        %v1175 = vunpack.c.l.b16 %v1136
        %v1176 = vunpack.c.l.b16 %v1137
        %v1177 = vunpack.c.l.b16 %v1138
        %v1178 = vunpack.c.l.b16 %v1139
        %v1179 = vunpack.c.l.b16 %v1140
        %v1180 = vunpack.c.l.b16 %v1141
        %v1181 = vunpack.c.l.b16 %v1142
        %v1182 = vunpack.c.l.b16 %v1143
        %v1183 = vunpack.c.l.b16 %v1144
        %v1184 = vunpack.c.l.b16 %v1145
        %v1185 = vpack.c.b16 %v1170, %v1169
        %v1186 = vpack.c.b16 %v1172, %v1171
        %v1187 = vpack.c.b16 %v1174, %v1173
        %v1188 = vpack.c.b16 %v1176, %v1175
        %v1189 = vpack.c.b16 %v1178, %v1177
        %v1190 = vpack.c.b16 %v1180, %v1179
        %v1191 = vpack.c.b16 %v1182, %v1181
        %v1192 = vpack.c.b16 %v1184, %v1183
        %1201 = vmatprep.subr.bf16.mxu0 0
        %1202 = vmatpush1.bf16.msra.mxu0 %v1192
        %1203 = vmatprep.subr.bf16.mxu0 0
        %1204 = vmatpush1.bf16.msra.mxu0 %v1191
        %1205 = vmatprep.subr.bf16.mxu0 0
        %1206 = vmatpush1.bf16.msra.mxu0 %v1190
        %1207 = vmatprep.subr.bf16.mxu0 0
        %1208 = vmatpush1.bf16.msra.mxu0 %v1189
        %1209 = vmatprep.subr.bf16.mxu0 0
        %1210 = vmatpush1.bf16.msra.mxu0 %v1188
        %1211 = vmatprep.subr.bf16.mxu0 0
        %1212 = vmatpush1.bf16.msra.mxu0 %v1187
        %1213 = vmatprep.subr.bf16.mxu0 0
        %1214 = vmatpush1.bf16.msra.mxu0 %v1186
        %1215 = vmatprep.subr.bf16.mxu0 0
        %1216 = vmatpush1.bf16.msra.mxu0 %v1185
        %1217 = vmatprep.subr.bf16.mxu0 0
        %1218 = vmatpush2.bf16.msra.mxu0 0
        %1219 = vmatprep.subr.bf16.mxu0 0
        %1220 = vmatpush2.bf16.msra.mxu0 0
        %1221 = vmatprep.subr.bf16.mxu0 0
        %1222 = vmatpush2.bf16.msra.mxu0 0
        %1223 = vmatprep.subr.bf16.mxu0 0
        %1224 = vmatpush2.bf16.msra.mxu0 0
        %1225 = vmatprep.subr.bf16.mxu0 0
        %1226 = vmatpush2.bf16.msra.mxu0 0
        %1227 = vmatprep.subr.bf16.mxu0 0
        %1228 = vmatpush2.bf16.msra.mxu0 0
        %1229 = vmatprep.subr.bf16.mxu0 0
        %1230 = vmatpush2.bf16.msra.mxu0 0
        %1231 = vmatprep.subr.bf16.mxu0 0
        %1232 = vmatpush2.bf16.msra.mxu0 0
        %1233 = vmatprep.mubr.bf16.mxu0 0
        %1234 = vmatmul.mubr.bf16.gmra.mxu0 %v1129
        %v1235 = vpop.f32.mrf.mxu0
        %v1236 = vadd.f32 %v1151, %v1235
        %v1237 = vpop.f32.mrf.mxu0
        %v1238 = vpop.f32.mrf.mxu0
        %v1239 = vadd.f32 %v1151, %v1238
        %v1240 = vpop.f32.mrf.mxu0
        %1241 = vdwg.mxu0
        %v1242 = vmax.f32 %v1236, 0.0
        %v1243 = vmax.f32 %v1239, 0.0
        %v1244 = vpack.c.bf16 %v1243, %v1242
        %v1245 = vld [vmem:[#allocation12] sm:$0xf]
        %v1246 = vld [vmem:[#allocation12 + $0x4] sm:$0xf]
        %v1247 = vld [vmem:[#allocation12 + $0x8] sm:$0xf]
        %v1248 = vld [vmem:[#allocation12 + $0xc] sm:$0xf]
        %v1249 = vld [vmem:[#allocation12 + $0x10] sm:$0xf]
        %v1250 = vld [vmem:[#allocation12 + $0x14] sm:$0xf]
        %v1251 = vld [vmem:[#allocation12 + $0x18] sm:$0xf]
        %v1252 = vld [vmem:[#allocation12 + $0x1c] sm:$0xf]
        %v1253 = vld [vmem:[#allocation12 + $0x20] sm:$0xf]
        %v1254 = vld [vmem:[#allocation12 + $0x24] sm:$0xf]
        %v1255 = vld [vmem:[#allocation12 + $0x28] sm:$0xf]
        %v1256 = vld [vmem:[#allocation12 + $0x2c] sm:$0xf]
        %v1257 = vld [vmem:[#allocation12 + $0x30] sm:$0xf]
        %v1258 = vld [vmem:[#allocation12 + $0x34] sm:$0xf]
        %v1259 = vld [vmem:[#allocation12 + $0x38] sm:$0xf]
        %v1260 = vld [vmem:[#allocation12 + $0x3c] sm:$0xf]
        %v1261 = vld [vmem:[%s10] sm:$0x1]
        %v1263 = vlaneseq
        %v1264 = vshrl.u32 %v1263, 7
        %v1265 = vsub.s32 0, %v1264
        %v1266 = vrot.slane %v1261, %v1265
        %v1284 = vunpack.c.l.b16 %v1245
        %v1285 = vunpack.c.l.b16 %v1246
        %v1286 = vunpack.c.l.b16 %v1247
        %v1287 = vunpack.c.l.b16 %v1248
        %v1288 = vunpack.c.l.b16 %v1249
        %v1289 = vunpack.c.l.b16 %v1250
        %v1290 = vunpack.c.l.b16 %v1251
        %v1291 = vunpack.c.l.b16 %v1252
        %v1292 = vunpack.c.l.b16 %v1253
        %v1293 = vunpack.c.l.b16 %v1254
        %v1294 = vunpack.c.l.b16 %v1255
        %v1295 = vunpack.c.l.b16 %v1256
        %v1296 = vunpack.c.l.b16 %v1257
        %v1297 = vunpack.c.l.b16 %v1258
        %v1298 = vunpack.c.l.b16 %v1259
        %v1299 = vunpack.c.l.b16 %v1260
        %v1300 = vpack.c.b16 %v1285, %v1284
        %v1301 = vpack.c.b16 %v1287, %v1286
        %v1302 = vpack.c.b16 %v1289, %v1288
        %v1303 = vpack.c.b16 %v1291, %v1290
        %v1304 = vpack.c.b16 %v1293, %v1292
        %v1305 = vpack.c.b16 %v1295, %v1294
        %v1306 = vpack.c.b16 %v1297, %v1296
        %v1307 = vpack.c.b16 %v1299, %v1298
        %1316 = vmatprep.subr.bf16.mxu0 0
        %1317 = vmatpush1.bf16.msra.mxu0 %v1307
        %1318 = vmatprep.subr.bf16.mxu0 0
        %1319 = vmatpush1.bf16.msra.mxu0 %v1306
        %1320 = vmatprep.subr.bf16.mxu0 0
        %1321 = vmatpush1.bf16.msra.mxu0 %v1305
        %1322 = vmatprep.subr.bf16.mxu0 0
        %1323 = vmatpush1.bf16.msra.mxu0 %v1304
        %1324 = vmatprep.subr.bf16.mxu0 0
        %1325 = vmatpush1.bf16.msra.mxu0 %v1303
        %1326 = vmatprep.subr.bf16.mxu0 0
        %1327 = vmatpush1.bf16.msra.mxu0 %v1302
        %1328 = vmatprep.subr.bf16.mxu0 0
        %1329 = vmatpush1.bf16.msra.mxu0 %v1301
        %1330 = vmatprep.subr.bf16.mxu0 0
        %1331 = vmatpush1.bf16.msra.mxu0 %v1300
        %1332 = vmatprep.subr.bf16.mxu0 0
        %1333 = vmatpush2.bf16.msra.mxu0 0
        %1334 = vmatprep.subr.bf16.mxu0 0
        %1335 = vmatpush2.bf16.msra.mxu0 0
        %1336 = vmatprep.subr.bf16.mxu0 0
        %1337 = vmatpush2.bf16.msra.mxu0 0
        %1338 = vmatprep.subr.bf16.mxu0 0
        %1339 = vmatpush2.bf16.msra.mxu0 0
        %1340 = vmatprep.subr.bf16.mxu0 0
        %1341 = vmatpush2.bf16.msra.mxu0 0
        %1342 = vmatprep.subr.bf16.mxu0 0
        %1343 = vmatpush2.bf16.msra.mxu0 0
        %1344 = vmatprep.subr.bf16.mxu0 0
        %1345 = vmatpush2.bf16.msra.mxu0 0
        %1346 = vmatprep.subr.bf16.mxu0 0
        %1347 = vmatpush2.bf16.msra.mxu0 0
        %1348 = vmatprep.mubr.bf16.mxu0 0
        %1349 = vmatmul.mubr.bf16.gmra.mxu0 %v1244
        %v1350 = vpop.f32.mrf.mxu0
        %v1351 = vadd.f32 %v1266, %v1350
        %v1352 = vpop.f32.mrf.mxu0
        %v1353 = vpop.f32.mrf.mxu0
        %v1354 = vadd.f32 %v1266, %v1353
        %v1355 = vpop.f32.mrf.mxu0
        %1356 = vdwg.mxu0
        %1357 = vmatprep.subr.mxu0 0.0
        %1358 = vmatpush1.msra.mxu0 0.0
        %1359 = vmatprep.subr.mxu0 0.0
        %1360 = vmatpush1.msra.mxu0 0.0
        %1361 = vmatprep.subr.mxu0 0.0
        %1362 = vmatpush1.msra.mxu0 0.0
        %1363 = vmatprep.subr.mxu0 0.0
        %1364 = vmatpush1.msra.mxu0 0.0
        %1365 = vmatprep.subr.mxu0 0.0
        %1366 = vmatpush1.msra.mxu0 0.0
        %1367 = vmatprep.subr.mxu0 0.0
        %1368 = vmatpush1.msra.mxu0 0.0
        %1369 = vmatprep.subr.mxu0 0.0
        %1370 = vmatpush1.msra.mxu0 0.0
        %1371 = vmatprep.subr.mxu0 0.0
        %1372 = vmatpush1.msra.mxu0 0.0
        %1373 = vmatprep.subr.mxu0 0.0
        %1374 = vmatpush1.msra.mxu0 0.0
        %1375 = vmatprep.subr.mxu0 0.0
        %1376 = vmatpush1.msra.mxu0 0.0
        %1377 = vmatprep.subr.mxu0 0.0
        %1378 = vmatpush1.msra.mxu0 0.0
        %1379 = vmatprep.subr.mxu0 0.0
        %1380 = vmatpush1.msra.mxu0 0.0
        %1381 = vmatprep.subr.mxu0 0.0
        %1382 = vmatpush1.msra.mxu0 0.0
        %1383 = vmatprep.subr.mxu0 0.0
        %1384 = vmatpush1.msra.mxu0 0.0
        %1385 = vmatprep.subr.mxu0 0.0
        %1386 = vmatpush1.msra.mxu0 %v1354
        %1387 = vmatprep.subr.mxu0 0.0
        %1388 = vmatpush1.msra.mxu0 %v1351
        %1389 = vmatprep.subr.mxu0 0.0
        %1390 = vmatpush2.msra.mxu0 0.0
        %1391 = vmatprep.subr.mxu0 0.0
        %1392 = vmatpush2.msra.mxu0 0.0
        %1393 = vmatprep.subr.mxu0 0.0
        %1394 = vmatpush2.msra.mxu0 0.0
        %1395 = vmatprep.subr.mxu0 0.0
        %1396 = vmatpush2.msra.mxu0 0.0
        %1397 = vmatprep.subr.mxu0 0.0
        %1398 = vmatpush2.msra.mxu0 0.0
        %1399 = vmatprep.subr.mxu0 0.0
        %1400 = vmatpush2.msra.mxu0 0.0
        %1401 = vmatprep.subr.mxu0 0.0
        %1402 = vmatpush2.msra.mxu0 0.0
        %1403 = vmatprep.subr.mxu0 0.0
        %1404 = vmatpush2.msra.mxu0 0.0
        %1405 = vmatprep.subr.mxu0 0.0
        %1406 = vmatpush2.msra.mxu0 0.0
        %1407 = vmatprep.subr.mxu0 0.0
        %1408 = vmatpush2.msra.mxu0 0.0
        %1409 = vmatprep.subr.mxu0 0.0
        %1410 = vmatpush2.msra.mxu0 0.0
        %1411 = vmatprep.subr.mxu0 0.0
        %1412 = vmatpush2.msra.mxu0 0.0
        %1413 = vmatprep.subr.mxu0 0.0
        %1414 = vmatpush2.msra.mxu0 0.0
        %1415 = vmatprep.subr.mxu0 0.0
        %1416 = vmatpush2.msra.mxu0 0.0
        %1417 = vmatprep.subr.mxu0 0.0
        %1418 = vmatpush2.msra.mxu0 0.0
        %1419 = vmatprep.subr.mxu0 0.0
        %1420 = vmatpush2.msra.mxu0 0.0
        %1421 = vmatprep.mubr.f32.mxu0 0.0
        %1422 = vmatmul.mubr.f32.gmra.mxu0 %v972
        %v1423 = vpop.f32.mrf.mxu0
        %v1424 = vadd.f32 0.0, %v1423
        %v1425 = vpop.f32.mrf.mxu0
        %1426 = vmatprep.mubr.f32.mxu0 0.0
        %1427 = vmatmul.mubr.f32.gmra.mxu0 %v975
        %v1428 = vpop.f32.mrf.mxu0
        %v1429 = vadd.f32 0.0, %v1428
        %v1430 = vpop.f32.mrf.mxu0
        %1431 = vdwg.mxu0
        %v1432 = vmax.f32 %v1424, 0.0
        %v1433 = vmax.f32 %v1429, 0.0
        %v1434 = vadd.f32 %v1432, %v1433
        %v1435 = vrot.slane %v1434, 4
        %v1436 = vadd.f32 %v1434, %v1435
        %v1437 = vrot.slane %v1436, 2
        %v1438 = vadd.f32 %v1436, %v1437
        %v1439 = vrot.slane %v1438, 1
        %v1440 = vadd.f32 %v1438, %v1439
        %v1441 = vmul.f32 %v1440, 0.0625
        %v1442 = vpack.c.bf16 %v1441, %v1441
        %v1443 = vld [vmem:[#allocation14] sm:$0xf]
        %v1444 = vld [vmem:[#allocation14 + $0x4] sm:$0xf]
        %v1445 = vld [vmem:[#allocation14 + $0x8] sm:$0xf]
        %v1446 = vld [vmem:[#allocation14 + $0xc] sm:$0xf]
        %v1447 = vld [vmem:[#allocation14 + $0x10] sm:$0xf]
        %v1448 = vld [vmem:[#allocation14 + $0x14] sm:$0xf]
        %v1449 = vld [vmem:[#allocation14 + $0x18] sm:$0xf]
        %v1450 = vld [vmem:[#allocation14 + $0x1c] sm:$0xf]
        %v1451 = vld [vmem:[#allocation14 + $0x20] sm:$0xf]
        %v1452 = vld [vmem:[#allocation14 + $0x24] sm:$0xf]
        %v1453 = vld [vmem:[#allocation14 + $0x28] sm:$0xf]
        %v1454 = vld [vmem:[#allocation14 + $0x2c] sm:$0xf]
        %v1455 = vld [vmem:[#allocation14 + $0x30] sm:$0xf]
        %v1456 = vld [vmem:[#allocation14 + $0x34] sm:$0xf]
        %v1457 = vld [vmem:[#allocation14 + $0x38] sm:$0xf]
        %v1458 = vld [vmem:[#allocation14 + $0x3c] sm:$0xf]
        %v1459 = vld [vmem:[%s12] sm:$0x1]
        %v1476 = vunpack.c.l.b16 %v1443
        %v1477 = vunpack.c.l.b16 %v1444
        %v1478 = vunpack.c.l.b16 %v1445
        %v1479 = vunpack.c.l.b16 %v1446
        %v1480 = vunpack.c.l.b16 %v1447
        %v1481 = vunpack.c.l.b16 %v1448
        %v1482 = vunpack.c.l.b16 %v1449
        %v1483 = vunpack.c.l.b16 %v1450
        %v1484 = vunpack.c.l.b16 %v1451
        %v1485 = vunpack.c.l.b16 %v1452
        %v1486 = vunpack.c.l.b16 %v1453
        %v1487 = vunpack.c.l.b16 %v1454
        %v1488 = vunpack.c.l.b16 %v1455
        %v1489 = vunpack.c.l.b16 %v1456
        %v1490 = vunpack.c.l.b16 %v1457
        %v1491 = vunpack.c.l.b16 %v1458
        %v1492 = vpack.c.b16 %v1477, %v1476
        %v1493 = vpack.c.b16 %v1479, %v1478
        %v1494 = vpack.c.b16 %v1481, %v1480
        %v1495 = vpack.c.b16 %v1483, %v1482
        %v1496 = vpack.c.b16 %v1485, %v1484
        %v1497 = vpack.c.b16 %v1487, %v1486
        %v1498 = vpack.c.b16 %v1489, %v1488
        %v1499 = vpack.c.b16 %v1491, %v1490
        %1508 = vmatprep.subr.bf16.mxu0 0
        %1509 = vmatpush1.bf16.msra.mxu0 %v1499
        %1510 = vmatprep.subr.bf16.mxu0 0
        %1511 = vmatpush1.bf16.msra.mxu0 %v1498
        %1512 = vmatprep.subr.bf16.mxu0 0
        %1513 = vmatpush1.bf16.msra.mxu0 %v1497
        %1514 = vmatprep.subr.bf16.mxu0 0
        %1515 = vmatpush1.bf16.msra.mxu0 %v1496
        %1516 = vmatprep.subr.bf16.mxu0 0
        %1517 = vmatpush1.bf16.msra.mxu0 %v1495
        %1518 = vmatprep.subr.bf16.mxu0 0
        %1519 = vmatpush1.bf16.msra.mxu0 %v1494
        %1520 = vmatprep.subr.bf16.mxu0 0
        %1521 = vmatpush1.bf16.msra.mxu0 %v1493
        %1522 = vmatprep.subr.bf16.mxu0 0
        %1523 = vmatpush1.bf16.msra.mxu0 %v1492
        %1524 = vmatprep.subr.bf16.mxu0 0
        %1525 = vmatpush2.bf16.msra.mxu0 0
        %1526 = vmatprep.subr.bf16.mxu0 0
        %1527 = vmatpush2.bf16.msra.mxu0 0
        %1528 = vmatprep.subr.bf16.mxu0 0
        %1529 = vmatpush2.bf16.msra.mxu0 0
        %1530 = vmatprep.subr.bf16.mxu0 0
        %1531 = vmatpush2.bf16.msra.mxu0 0
        %1532 = vmatprep.subr.bf16.mxu0 0
        %1533 = vmatpush2.bf16.msra.mxu0 0
        %1534 = vmatprep.subr.bf16.mxu0 0
        %1535 = vmatpush2.bf16.msra.mxu0 0
        %1536 = vmatprep.subr.bf16.mxu0 0
        %1537 = vmatpush2.bf16.msra.mxu0 0
        %1538 = vmatprep.subr.bf16.mxu0 0
        %1539 = vmatpush2.bf16.msra.mxu0 0
        %1540 = vmatprep.mubr.bf16.mxu0 0
        %1541 = vmatmul.mubr.bf16.gmra.mxu0 %v1442
        %v1542 = vpop.f32.mrf.mxu0
        %v1543 = vadd.f32 %v1459, %v1542
        %v1544 = vpop.f32.mrf.mxu0
        %v1545 = vpop.f32.mrf.mxu0
        %v1546 = vpop.f32.mrf.mxu0
        %1547 = vdwg.mxu0
        %v1548 = vld [vmem:[%s13] sm:$0x1]
        %vm1549 = vcmp.gt.f32.partialorder %v1543, 0.0
        %v1550 = vmul.f32 %v1548, %v1543
        %v1551 = vsel %vm1549, %v1543, %v1550
        %v1552 = vpack.c.bf16 %v1551, %v1551
        %v1553 = vld [vmem:[#allocation15] sm:$0xf]
        %v1554 = vld [vmem:[#allocation15 + $0x4] sm:$0xf]
        %v1555 = vld [vmem:[#allocation15 + $0x8] sm:$0xf]
        %v1556 = vld [vmem:[#allocation15 + $0xc] sm:$0xf]
        %v1557 = vld [vmem:[#allocation15 + $0x10] sm:$0xf]
        %v1558 = vld [vmem:[#allocation15 + $0x14] sm:$0xf]
        %v1559 = vld [vmem:[#allocation15 + $0x18] sm:$0xf]
        %v1560 = vld [vmem:[#allocation15 + $0x1c] sm:$0xf]
        %v1561 = vld [vmem:[#allocation15 + $0x20] sm:$0xf]
        %v1562 = vld [vmem:[#allocation15 + $0x24] sm:$0xf]
        %v1563 = vld [vmem:[#allocation15 + $0x28] sm:$0xf]
        %v1564 = vld [vmem:[#allocation15 + $0x2c] sm:$0xf]
        %v1565 = vld [vmem:[#allocation15 + $0x30] sm:$0xf]
        %v1566 = vld [vmem:[#allocation15 + $0x34] sm:$0xf]
        %v1567 = vld [vmem:[#allocation15 + $0x38] sm:$0xf]
        %v1568 = vld [vmem:[#allocation15 + $0x3c] sm:$0xf]
        %v1569 = vld [vmem:[%s15] sm:$0x1]
        %v1586 = vunpack.c.l.b16 %v1553
        %v1587 = vunpack.c.l.b16 %v1554
        %v1588 = vunpack.c.l.b16 %v1555
        %v1589 = vunpack.c.l.b16 %v1556
        %v1590 = vunpack.c.l.b16 %v1557
        %v1591 = vunpack.c.l.b16 %v1558
        %v1592 = vunpack.c.l.b16 %v1559
        %v1593 = vunpack.c.l.b16 %v1560
        %v1594 = vunpack.c.l.b16 %v1561
        %v1595 = vunpack.c.l.b16 %v1562
        %v1596 = vunpack.c.l.b16 %v1563
        %v1597 = vunpack.c.l.b16 %v1564
        %v1598 = vunpack.c.l.b16 %v1565
        %v1599 = vunpack.c.l.b16 %v1566
        %v1600 = vunpack.c.l.b16 %v1567
        %v1601 = vunpack.c.l.b16 %v1568
        %v1602 = vpack.c.b16 %v1587, %v1586
        %v1603 = vpack.c.b16 %v1589, %v1588
        %v1604 = vpack.c.b16 %v1591, %v1590
        %v1605 = vpack.c.b16 %v1593, %v1592
        %v1606 = vpack.c.b16 %v1595, %v1594
        %v1607 = vpack.c.b16 %v1597, %v1596
        %v1608 = vpack.c.b16 %v1599, %v1598
        %v1609 = vpack.c.b16 %v1601, %v1600
        %1618 = vmatprep.subr.bf16.mxu0 0
        %1619 = vmatpush1.bf16.msra.mxu0 %v1609
        %1620 = vmatprep.subr.bf16.mxu0 0
        %1621 = vmatpush1.bf16.msra.mxu0 %v1608
        %1622 = vmatprep.subr.bf16.mxu0 0
        %1623 = vmatpush1.bf16.msra.mxu0 %v1607
        %1624 = vmatprep.subr.bf16.mxu0 0
        %1625 = vmatpush1.bf16.msra.mxu0 %v1606
        %1626 = vmatprep.subr.bf16.mxu0 0
        %1627 = vmatpush1.bf16.msra.mxu0 %v1605
        %1628 = vmatprep.subr.bf16.mxu0 0
        %1629 = vmatpush1.bf16.msra.mxu0 %v1604
        %1630 = vmatprep.subr.bf16.mxu0 0
        %1631 = vmatpush1.bf16.msra.mxu0 %v1603
        %1632 = vmatprep.subr.bf16.mxu0 0
        %1633 = vmatpush1.bf16.msra.mxu0 %v1602
        %1634 = vmatprep.subr.bf16.mxu0 0
        %1635 = vmatpush2.bf16.msra.mxu0 0
        %1636 = vmatprep.subr.bf16.mxu0 0
        %1637 = vmatpush2.bf16.msra.mxu0 0
        %1638 = vmatprep.subr.bf16.mxu0 0
        %1639 = vmatpush2.bf16.msra.mxu0 0
        %1640 = vmatprep.subr.bf16.mxu0 0
        %1641 = vmatpush2.bf16.msra.mxu0 0
        %1642 = vmatprep.subr.bf16.mxu0 0
        %1643 = vmatpush2.bf16.msra.mxu0 0
        %1644 = vmatprep.subr.bf16.mxu0 0
        %1645 = vmatpush2.bf16.msra.mxu0 0
        %1646 = vmatprep.subr.bf16.mxu0 0
        %1647 = vmatpush2.bf16.msra.mxu0 0
        %1648 = vmatprep.subr.bf16.mxu0 0
        %1649 = vmatpush2.bf16.msra.mxu0 0
        %1650 = vmatprep.mubr.bf16.mxu0 0
        %1651 = vmatmul.mubr.bf16.gmra.mxu0 %v1552
        %v1652 = vpop.f32.mrf.mxu0
        %v1653 = vadd.f32 %v1569, %v1652
        %v1654 = vpop.f32.mrf.mxu0
        %v1655 = vpop.f32.mrf.mxu0
        %v1656 = vpop.f32.mrf.mxu0
        %1657 = vdwg.mxu0
        %v1658 = vlaneseq
        %v1659 = vshrl.u32 %v1658, 7
        %v1660 = vsub.s32 0, %v1659
        %v1661 = vrot.slane %v1653, %v1660
        %1662 = vst [vmem:[%s653] sm:$0xff] %v1661
        %s1663 = sand.u32 %s384, 1
        %s1664 = scalar_lea.sflag [#allocation4], %s1663
        %s1665 = sand.u32 %s384, 1
        %s1666 = smul.addr %s1665, 8
        %s1667 = scalar_lea.vmem [#allocation17], %s1666
        // Predicated region
        $region121: #{tpu_custom_call.1} parent=83 // pred_check
          %p1668 = pneg %p394
        $region122: #{tpu_custom_call.1} parent=83 // pred_check_branch
          %1670 = sbr.rel (%p1668) target = $region124
        $region123: #{tpu_custom_call.1} parent=83 // pred_region
          %s1672 = ssub.s32 128, 128
          %1673 = vsyncadd %s1664, %s1672
          %s1674 = smul.addr %s35, 128
          %s1675 = scalar_lea.hbm %s16, %s1674
          %s1677 = sshll.u32 %s1667, 4
          %s1678 = int_to_ptr.vmem [resolvable:$true] %s1677
          %1680 = dma.vmem_to_hbm [thread:$0]  %s1678, 128, %s1675, %s1664
        $region124: #{tpu_custom_call.1} parent=83 // pred_fallthru
          _
      $region84: #{tpu_custom_call.1} parent=5 // pred_fallthru
        _
      %p1681 = scmp.le.s32.totalorder 2, %s30
      // Predicated region
      $region125: #{tpu_custom_call.1} parent=5 // pred_check
        %p1682 = pneg %p1681
      $region126: #{tpu_custom_call.1} parent=5 // pred_check_branch
        %1684 = sbr.rel (%p1682) target = $region128
      $region127: #{tpu_custom_call.1} parent=5 // pred_region
        %s1685 = ssub.s32 %s30, 2
        // Predicated region
        $region129: #{tpu_custom_call.1} parent=127 // pred_check
          %p1686 = pneg %p400
        $region130: #{tpu_custom_call.1} parent=127 // pred_check_branch
          %1688 = sbr.rel (%p1686) target = $region132
        $region131: #{tpu_custom_call.1} parent=127 // pred_region
          %s1689 = sand.u32 %s385, 1
          %s1690 = scalar_lea.sflag [#allocation4], %s1689
          %s1691 = sand.u32 %s385, 1
          %s1692 = smul.addr %s1691, 8
          %s1693 = scalar_lea.vmem [#allocation17], %s1692
          %1694 = dma.done %s1690, 128
        $region132: #{tpu_custom_call.1} parent=127 // pred_fallthru
          _
      $region128: #{tpu_custom_call.1} parent=5 // pred_fallthru
        _
    $region6: #{tpu_custom_call.1} parent=1 // loop_footer
      %s34 = sadd.s32 1, %s30
    $region7: #{tpu_custom_call.1} parent=1 // loop_footer_branch
      %29 = sbr.rel target = $region3
    $region8: #{tpu_custom_call.1} parent=1 // loop_exit
      _
    %1695 = vsyncpa [#allocation3], 1
    %s1696 = scalar_lea.sflag [#allocation3], 1
    %1697 = vsyncpa %s1696, 1
    %1698 = vsyncpa [#allocation6], 1
    %1699 = vsyncpa [#allocation10], 1
    %1700 = vsyncpa [#allocation13], 1
    %1701 = vsyncpa [#allocation16], 1
    %1702 = vsyncpa [#allocation4], 1
    %s1703 = scalar_lea.sflag [#allocation4], 1
    %1704 = vsyncpa %s1703, 1

</llo_original>
